<compile_context>
chip_gen: v7x
topology: tpu7x:2x2x1
jax: 0.10.0
libtpu: 0.0.40
codegen_flags: <defaults>
</compile_context>

<pallas_src>
import functools

import jax
import jax.numpy as jnp
from jax import lax
from jax.experimental import pallas as pl
from jax.experimental.pallas import tpu as pltpu

EPS = 1e-5          # nn.LayerNorm default
LANE = 128          # TPU lane width
ROW_ALIGN = 32      # native sublane tile for int8 blocks (also covers bf16/f32)
NEG_INF = -1e10     # matches logits[available_actions == 0] = -1e10
PAD_NEG = -1e30     # padded action lanes: strictly below NEG_INF, exp -> 0


def _round_up(x, m):
    return (x + m - 1) // m * m


def _cdiv(a, b):
    return -(-a // b)


def _pad2(a, rows, cols):
    r, c = a.shape
    return jnp.pad(a, ((0, rows - r), (0, cols - c)))


def r_actor_kernel(obs_ref, h0_ref, masks_ref, avail_ref,
                   fng_ref, fnb_ref,
                   w1_ref, b1_ref, g1_ref, bt1_ref,
                   w2_ref, b2_ref, g2_ref, bt2_ref,
                   wx_ref, wh_ref, bg_ref,
                   gr_ref, br_ref, wact_ref, bact_ref,
                   scal_ref, hout_ref,
                   *, d_true, h_true, a_true):
    tb = obs_ref.shape[0]
    dp = obs_ref.shape[1]
    hp = h0_ref.shape[1]
    ap = avail_ref.shape[1]

    # Real-lane masks for LayerNorm variance (padded lanes excluded).
    d_mask = (lax.broadcasted_iota(jnp.int32, (1, dp), 1) < d_true
              ).astype(jnp.float32)
    h_mask = (lax.broadcasted_iota(jnp.int32, (1, hp), 1) < h_true
              ).astype(jnp.float32)

    def ln(x, g_ref, b_ref, mask, n):
        """Two-pass LayerNorm over the last axis on the true (unpadded) dim.

        Padded lanes of x are zero so mu is unaffected; the mask removes their
        (x - mu)^2 contribution; gamma/beta are zero on padded lanes so the
        output stays exactly zero there."""
        inv_n = 1.0 / n
        mu = jnp.sum(x, axis=-1, keepdims=True) * inv_n
        d = x - mu
        var = jnp.sum(d * d * mask, axis=-1, keepdims=True) * inv_n
        return d * lax.rsqrt(var + EPS) * g_ref[...] + b_ref[...]

    def mm(x, w_ref, b_ref):
        """bf16 operands at the MXU boundary, f32 accumulation, f32 bias."""
        return jnp.dot(x.astype(w_ref.dtype), w_ref[...],
                       preferred_element_type=jnp.float32) + b_ref[...]

    # ---------------- MLPBase: feature_norm -> fc1 -> fc_h -----------------
    x = ln(obs_ref[...], fng_ref, fnb_ref, d_mask, d_true)
    x = jnp.maximum(mm(x, w1_ref, b1_ref), 0.0)
    x = ln(x, g1_ref, bt1_ref, h_mask, h_true)
    x = jnp.maximum(mm(x, w2_ref, b2_ref), 0.0)
    x = ln(x, g2_ref, bt2_ref, h_mask, h_true)

    # ---------------- RNNLayer: one GRU step + LayerNorm --------------------
    h = h0_ref[...] * masks_ref[...]                       # (TB,Hp) * (TB,1)
    # All four gate matmuls fused into two N=4*Hp dots; each gate is a whole
    # 128-lane column tile, so the slices below are free static views.
    gates = (jnp.dot(x.astype(wx_ref.dtype), wx_ref[...],
                     preferred_element_type=jnp.float32)
             + jnp.dot(h.astype(wh_ref.dtype), wh_ref[...],
                       preferred_element_type=jnp.float32)
             + bg_ref[...])                                # (TB, 4*Hp)
    r = jax.nn.sigmoid(gates[:, 0 * hp:1 * hp])
    z = jax.nn.sigmoid(gates[:, 1 * hp:2 * hp])
    gi_n = gates[:, 2 * hp:3 * hp]                         # W_in x + b_in
    gh_n = gates[:, 3 * hp:4 * hp]                         # W_hn h + b_hn
    n_g = jnp.tanh(gi_n + r * gh_n)
    h_new = (1.0 - z) * n_g + z * h
    hout_ref[...] = h_new
    feat = ln(h_new, gr_ref, br_ref, h_mask, h_true)

    # ---------------- ACTLayer: masked Categorical, deterministic -----------
    logits = mm(feat, wact_ref, bact_ref)                  # f32 (TB, Ap)
    lane = lax.broadcasted_iota(jnp.int32, (tb, ap), 1)    # shared iota
    real = lane < a_true
    avail_ok = avail_ref[...] != 0                         # int8 flags
    logits = jnp.where(real, jnp.where(avail_ok, logits, NEG_INF), PAD_NEG)
    max_l = jnp.max(logits, axis=-1, keepdims=True)
    lse = max_l + jnp.log(jnp.sum(jnp.exp(logits - max_l), axis=-1,
                                  keepdims=True))
    cand = jnp.where(logits >= max_l, lane, ap)
    act_f = jnp.min(cand, axis=-1, keepdims=True).astype(jnp.float32)
    logp = max_l - lse                                     # log_prob of argmax

    # Lane-dense packed scalar output slab: lane0 = action, lane1 = log_prob.
    if ap == scal_ref.shape[1]:
        out_lane = lane
    else:
        out_lane = lax.broadcasted_iota(jnp.int32, (tb, scal_ref.shape[1]), 1)
    scal_ref[...] = jnp.where(out_lane == 0, act_f,
                              jnp.where(out_lane == 1, logp, 0.0))


def prepare_params(p, hidden, compute_dtype=jnp.bfloat16):
    """Zero-pad all feature dims to 128 lanes, build fully-fused GRU gate
    weights [r | z | gi_n | gh_n], and cast matmul weights to bf16
    (biases / LayerNorm params stay f32)."""
    D = p["w1"].shape[0]
    H = hidden
    A = p["wact"].shape[1]
    Dp, Hp, Ap = _round_up(D, LANE), _round_up(H, LANE), _round_up(A, LANE)

    wih, whh, bih, bhh = p["wih"], p["whh"], p["bih"], p["bhh"]
    # Column tiles (each Hp lanes wide): 0 = r, 1 = z, 2 = gi_n, 3 = gh_n.
    w_x = jnp.zeros((Hp, 4 * Hp), jnp.float32)
    w_h = jnp.zeros((Hp, 4 * Hp), jnp.float32)
    b_g = jnp.zeros((1, 4 * Hp), jnp.float32)
    for g in range(3):                               # x feeds r, z, gi_n
        w_x = w_x.at[:H, g * Hp:g * Hp + H].set(wih[:, g * H:(g + 1) * H])
    for g, tile in ((0, 0), (1, 1), (2, 3)):          # h feeds r, z, gh_n
        w_h = w_h.at[:H, tile * Hp:tile * Hp + H].set(whh[:, g * H:(g + 1) * H])
    b_g = b_g.at[:, 0 * Hp:0 * Hp + H].set(bih[:, 0:H] + bhh[:, 0:H])
    b_g = b_g.at[:, 1 * Hp:1 * Hp + H].set(bih[:, H:2 * H] + bhh[:, H:2 * H])
    b_g = b_g.at[:, 2 * Hp:2 * Hp + H].set(bih[:, 2 * H:3 * H])
    b_g = b_g.at[:, 3 * Hp:3 * Hp + H].set(bhh[:, 2 * H:3 * H])

    cd = compute_dtype
    q = dict(
        fng=_pad2(p["fng"], 1, Dp), fnb=_pad2(p["fnb"], 1, Dp),
        w1=_pad2(p["w1"], Dp, Hp).astype(cd), b1=_pad2(p["b1"], 1, Hp),
        g1=_pad2(p["g1"], 1, Hp), bt1=_pad2(p["bt1"], 1, Hp),
        w2=_pad2(p["w2"], Hp, Hp).astype(cd), b2=_pad2(p["b2"], 1, Hp),
        g2=_pad2(p["g2"], 1, Hp), bt2=_pad2(p["bt2"], 1, Hp),
        w_x=w_x.astype(cd), w_h=w_h.astype(cd), b_g=b_g,
        gr=_pad2(p["gr"], 1, Hp), br=_pad2(p["br"], 1, Hp),
        wact=_pad2(p["wact"], Hp, Ap).astype(cd), bact=_pad2(p["bact"], 1, Ap),
    )
    dims = dict(D=D, H=H, A=A, Dp=Dp, Hp=Hp, Ap=Ap)
    return q, dims


_WEIGHT_KEYS = ("fng", "fnb", "w1", "b1", "g1", "bt1", "w2", "b2", "g2", "bt2",
                "w_x", "w_h", "b_g", "gr", "br", "wact", "bact")


def _choose_tile(B, tile_b):
    """Pick (TILE_B, Bp): >= 2 (even) grid steps when the batch allows, so
    megacore on v7x gets both TensorCores; minimize remainder padding; keep
    rows 32-aligned so int8/bf16/f32 blocks all sit on native tiling."""
    n_steps = max(2, _cdiv(B, tile_b))
    n_steps += n_steps & 1                      # prefer an even step count
    tb = _round_up(_cdiv(B, n_steps), ROW_ALIGN)
    bp = _round_up(B, tb)
    return tb, bp


def r_actor_forward(obs, rnn_states, masks, available_actions,
                    padded_params, dims, *, tile_b=1024):
    """Returns (actions (B,1) int32, action_log_probs (B,1) f32,
                rnn_states (B,1,H) f32)."""
    B = obs.shape[0]
    D, H, A = dims["D"], dims["H"], dims["A"]
    Dp, Hp, Ap = dims["Dp"], dims["Hp"], dims["Ap"]

    TB, Bp = _choose_tile(B, tile_b)

    obs_p = _pad2(obs, Bp, Dp)
    h0_p = _pad2(rnn_states[:, 0, :], Bp, Hp)        # recurrent_N = 1
    masks_p = _pad2(masks, Bp, 1)
    avail_p = _pad2((available_actions != 0).astype(jnp.int8), Bp, Ap)

    p = padded_params
    weights = [p[k] for k in _WEIGHT_KEYS]

    row = lambda i: (i, 0)
    const = lambda i: (0, 0)
    in_specs = ([pl.BlockSpec((TB, Dp), row),
                 pl.BlockSpec((TB, Hp), row),
                 pl.BlockSpec((TB, 1), row),
                 pl.BlockSpec((TB, Ap), row)]
                + [pl.BlockSpec(w.shape, const) for w in weights])
    out_specs = (pl.BlockSpec((TB, LANE), row),
                 pl.BlockSpec((TB, Hp), row))

    flops = int(2 * Bp * (Dp * Hp + Hp * Hp + 2 * Hp * (4 * Hp) + Hp * Ap))
    transcendentals = int(Bp * (3 * Hp + Ap + 6))
    in_arrays = [obs_p, h0_p, masks_p, avail_p] + weights
    bytes_accessed = int(sum(a.size * a.dtype.itemsize for a in in_arrays)
                         + Bp * LANE * 4 + Bp * Hp * 4)

    kern = functools.partial(r_actor_kernel, d_true=D, h_true=H, a_true=A)
    scal, h_out = pl.pallas_call(
        kern,
        out_shape=(jax.ShapeDtypeStruct((Bp, LANE), jnp.float32),
                   jax.ShapeDtypeStruct((Bp, Hp), jnp.float32)),
        grid=(Bp // TB,),
        in_specs=in_specs,
        out_specs=out_specs,
        compiler_params=pltpu.CompilerParams(
            dimension_semantics=("parallel",),
            vmem_limit_bytes=48 * 1024 * 1024),
        cost_estimate=pl.CostEstimate(flops=flops,
                                      transcendentals=transcendentals,
                                      bytes_accessed=bytes_accessed),
    )(*in_arrays)

    actions = scal[:B, 0:1].astype(jnp.int32)
    logp = scal[:B, 1:2]
    h_new = h_out[:B, :H]
    return actions, logp, h_new[:, None, :]


# --------------------------- pure-JAX reference -----------------------------
def _ln_ref(x, g, b):
    mu = jnp.mean(x, axis=-1, keepdims=True)
    var = jnp.mean((x - mu) ** 2, axis=-1, keepdims=True)
    return (x - mu) * lax.rsqrt(var + EPS) * g + b


def r_actor_reference(obs, rnn_states, masks, avail, p):
    """Pure-JAX reference on the original (unpadded) params, applying the same
    bf16-at-the-dot-boundary quantization as the kernel."""
    cd = jnp.bfloat16

    def mm(x, w, b):
        return jnp.dot(x.astype(cd), w.astype(cd),
                       preferred_element_type=jnp.float32) + b

    H = p["w1"].shape[1]
    x = _ln_ref(obs, p["fng"], p["fnb"])
    x = _ln_ref(jnp.maximum(mm(x, p["w1"], p["b1"]), 0.0), p["g1"], p["bt1"])
    x = _ln_ref(jnp.maximum(mm(x, p["w2"], p["b2"]), 0.0), p["g2"], p["bt2"])
    h = rnn_states[:, 0, :] * masks
    gi = mm(x, p["wih"], p["bih"])
    gh = mm(h, p["whh"], p["bhh"])
    r = jax.nn.sigmoid(gi[:, :H] + gh[:, :H])
    z = jax.nn.sigmoid(gi[:, H:2 * H] + gh[:, H:2 * H])
    n = jnp.tanh(gi[:, 2 * H:] + r * gh[:, 2 * H:])
    h_new = (1.0 - z) * n + z * h
    feat = _ln_ref(h_new, p["gr"], p["br"])
    logits = mm(feat, p["wact"], p["bact"])
    logits = jnp.where(avail > 0, logits, NEG_INF)
    act = jnp.argmax(logits, axis=-1, keepdims=True).astype(jnp.int32)
    logp = jnp.take_along_axis(jax.nn.log_softmax(logits, axis=-1), act,
                               axis=-1)
    return act, logp, h_new[:, None, :]


if __name__ == "__main__":
    # ActorModel(112, 8): 112-dim policy-head input, 8 discrete actions.
    B, D, H, A, N = 8, 112, 64, 8, 1
    key = jax.random.PRNGKey(0)
    ks = jax.random.split(key, 16)

    def w(k, shape, s=0.1):
        return (s * jax.random.normal(k, shape)).astype(jnp.float32)

    params = dict(
        fng=jnp.ones((1, D), jnp.float32), fnb=jnp.zeros((1, D), jnp.float32),
        w1=w(ks[0], (D, H)), b1=w(ks[1], (1, H), 0.05),
        g1=jnp.ones((1, H), jnp.float32), bt1=jnp.zeros((1, H), jnp.float32),
        w2=w(ks[2], (H, H)), b2=w(ks[3], (1, H), 0.05),
        g2=jnp.ones((1, H), jnp.float32), bt2=jnp.zeros((1, H), jnp.float32),
        wih=w(ks[4], (H, 3 * H)), bih=w(ks[5], (1, 3 * H)),
        whh=w(ks[6], (H, 3 * H)), bhh=w(ks[7], (1, 3 * H)),
        gr=jnp.ones((1, H), jnp.float32), br=jnp.zeros((1, H), jnp.float32),
        wact=w(ks[8], (H, A)), bact=w(ks[9], (1, A), 0.05),
    )

    obs = jax.random.normal(ks[10], (B, D), jnp.float32)
    rnn_states = jax.random.normal(ks[11], (B, N, H), jnp.float32)
    masks = (jax.random.uniform(ks[12], (B, 1)) > 0.3).astype(jnp.float32)
    available_actions = jnp.ones((B, A), jnp.float32).at[:, -1].set(0.0)

    padded_params, dims = prepare_params(params, hidden=H)
    actions, logp, h_out = r_actor_forward(
        obs, rnn_states, masks, available_actions, padded_params, dims)
    jax.block_until_ready((actions, logp, h_out))

    # Validate against the pure-JAX reference.
    a_ref, lp_ref, h_ref = r_actor_reference(
        obs, rnn_states, masks, available_actions, params)
    assert actions.shape == (B, 1) and logp.shape == (B, 1)
    assert h_out.shape == (B, N, H)
    assert jnp.array_equal(actions, a_ref), "action mismatch"
    assert jnp.allclose(logp, lp_ref, atol=2e-3, rtol=2e-3), "log_prob mismatch"
    assert jnp.allclose(h_out, h_ref, atol=2e-3, rtol=2e-3), "rnn_state mismatch"

    print("KERNEL_OK")
</pallas_src>

<mosaic_0001>
module attributes {stable_mosaic.version = 11 : i64} {
  func.func @r_actor_kernel(%arg0: i32, %arg1: memref<32x128xf32, #tpu.memory_space<vmem>>, %arg2: memref<32x128xf32, #tpu.memory_space<vmem>>, %arg3: memref<32x1xf32, #tpu.memory_space<vmem>>, %arg4: memref<32x128xi8, #tpu.memory_space<vmem>>, %arg5: memref<1x128xf32, #tpu.memory_space<vmem>>, %arg6: memref<1x128xf32, #tpu.memory_space<vmem>>, %arg7: memref<128x128xbf16, #tpu.memory_space<vmem>>, %arg8: memref<1x128xf32, #tpu.memory_space<vmem>>, %arg9: memref<1x128xf32, #tpu.memory_space<vmem>>, %arg10: memref<1x128xf32, #tpu.memory_space<vmem>>, %arg11: memref<128x128xbf16, #tpu.memory_space<vmem>>, %arg12: memref<1x128xf32, #tpu.memory_space<vmem>>, %arg13: memref<1x128xf32, #tpu.memory_space<vmem>>, %arg14: memref<1x128xf32, #tpu.memory_space<vmem>>, %arg15: memref<128x512xbf16, #tpu.memory_space<vmem>>, %arg16: memref<128x512xbf16, #tpu.memory_space<vmem>>, %arg17: memref<1x512xf32, #tpu.memory_space<vmem>>, %arg18: memref<1x128xf32, #tpu.memory_space<vmem>>, %arg19: memref<1x128xf32, #tpu.memory_space<vmem>>, %arg20: memref<128x128xbf16, #tpu.memory_space<vmem>>, %arg21: memref<1x128xf32, #tpu.memory_space<vmem>>, %arg22: memref<32x128xf32, #tpu.memory_space<vmem>>, %arg23: memref<32x128xf32, #tpu.memory_space<vmem>>) attributes {dimension_semantics = [#tpu.dimension_semantics<parallel>], iteration_bounds = array<i64: 1>, scalar_prefetch = 0 : i64, scratch_operands = 0 : i64, tpu.core_type = #tpu.core_type<tc>, window_params = [{transform_indices = @transform_0, window_bounds = array<i64: 32, 128>}, {transform_indices = @transform_1, window_bounds = array<i64: 32, 128>}, {transform_indices = @transform_2, window_bounds = array<i64: 32, 1>}, {transform_indices = @transform_3, window_bounds = array<i64: 32, 128>}, {pipeline_mode = #tpu.pipeline_mode<synchronous>, transform_indices = @transform_4, window_bounds = array<i64: 1, 128>}, {pipeline_mode = #tpu.pipeline_mode<synchronous>, transform_indices = @transform_5, window_bounds = array<i64: 1, 128>}, {pipeline_mode = #tpu.pipeline_mode<synchronous>, transform_indices = @transform_6, window_bounds = array<i64: 128, 128>}, {pipeline_mode = #tpu.pipeline_mode<synchronous>, transform_indices = @transform_7, window_bounds = array<i64: 1, 128>}, {pipeline_mode = #tpu.pipeline_mode<synchronous>, transform_indices = @transform_8, window_bounds = array<i64: 1, 128>}, {pipeline_mode = #tpu.pipeline_mode<synchronous>, transform_indices = @transform_9, window_bounds = array<i64: 1, 128>}, {pipeline_mode = #tpu.pipeline_mode<synchronous>, transform_indices = @transform_10, window_bounds = array<i64: 128, 128>}, {pipeline_mode = #tpu.pipeline_mode<synchronous>, transform_indices = @transform_11, window_bounds = array<i64: 1, 128>}, {pipeline_mode = #tpu.pipeline_mode<synchronous>, transform_indices = @transform_12, window_bounds = array<i64: 1, 128>}, {pipeline_mode = #tpu.pipeline_mode<synchronous>, transform_indices = @transform_13, window_bounds = array<i64: 1, 128>}, {pipeline_mode = #tpu.pipeline_mode<synchronous>, transform_indices = @transform_14, window_bounds = array<i64: 128, 512>}, {pipeline_mode = #tpu.pipeline_mode<synchronous>, transform_indices = @transform_15, window_bounds = array<i64: 128, 512>}, {pipeline_mode = #tpu.pipeline_mode<synchronous>, transform_indices = @transform_16, window_bounds = array<i64: 1, 512>}, {pipeline_mode = #tpu.pipeline_mode<synchronous>, transform_indices = @transform_17, window_bounds = array<i64: 1, 128>}, {pipeline_mode = #tpu.pipeline_mode<synchronous>, transform_indices = @transform_18, window_bounds = array<i64: 1, 128>}, {pipeline_mode = #tpu.pipeline_mode<synchronous>, transform_indices = @transform_19, window_bounds = array<i64: 128, 128>}, {pipeline_mode = #tpu.pipeline_mode<synchronous>, transform_indices = @transform_20, window_bounds = array<i64: 1, 128>}, {transform_indices = @transform_21, window_bounds = array<i64: 32, 128>}, {transform_indices = @transform_22, window_bounds = array<i64: 32, 128>}]} {
    %0 = tpu.iota {dimensions = array<i32: 1>} : vector<1x128xi32>
    %c112_i32 = arith.constant 112 : i32
    %1 = vector.broadcast %c112_i32 : i32 to vector<1x128xi32>
    %2 = arith.cmpi slt, %0, %1 : vector<1x128xi32>
    %3 = arith.extui %2 : vector<1x128xi1> to vector<1x128xi32>
    %4 = arith.sitofp %3 : vector<1x128xi32> to vector<1x128xf32>
    %5 = tpu.iota {dimensions = array<i32: 1>} : vector<1x128xi32>
    %c64_i32 = arith.constant 64 : i32
    %6 = vector.broadcast %c64_i32 : i32 to vector<1x128xi32>
    %7 = arith.cmpi slt, %5, %6 : vector<1x128xi32>
    %8 = arith.extui %7 : vector<1x128xi1> to vector<1x128xi32>
    %9 = arith.sitofp %8 : vector<1x128xi32> to vector<1x128xf32>
    %c0 = arith.constant 0 : index
    %c0_0 = arith.constant 0 : index
    %10 = vector.load %arg1[%c0, %c0_0] : memref<32x128xf32, #tpu.memory_space<vmem>>, vector<32x128xf32>
    %cst = arith.constant dense<0.000000e+00> : vector<32xf32>
    %11 = vector.multi_reduction <add>, %10, %cst [1] : vector<32x128xf32> to vector<32xf32>
    %12 = vector.shape_cast %11 : vector<32xf32> to vector<32x1xf32>
    %cst_1 = arith.constant 0.00892857183 : f32
    %13 = vector.broadcast %cst_1 : f32 to vector<32x1xf32>
    %14 = arith.mulf %12, %13 : vector<32x1xf32>
    %15 = vector.broadcast %14 : vector<32x1xf32> to vector<32x128xf32>
    %16 = arith.subf %10, %15 : vector<32x128xf32>
    %17 = arith.mulf %16, %16 : vector<32x128xf32>
    %18 = vector.broadcast %4 : vector<1x128xf32> to vector<32x128xf32>
    %19 = arith.mulf %17, %18 : vector<32x128xf32>
    %cst_2 = arith.constant dense<0.000000e+00> : vector<32xf32>
    %20 = vector.multi_reduction <add>, %19, %cst_2 [1] : vector<32x128xf32> to vector<32xf32>
    %21 = vector.shape_cast %20 : vector<32xf32> to vector<32x1xf32>
    %cst_3 = arith.constant 0.00892857183 : f32
    %22 = vector.broadcast %cst_3 : f32 to vector<32x1xf32>
    %23 = arith.mulf %21, %22 : vector<32x1xf32>
    %cst_4 = arith.constant 9.99999974E-6 : f32
    %24 = vector.broadcast %cst_4 : f32 to vector<32x1xf32>
    %25 = arith.addf %23, %24 : vector<32x1xf32>
    %26 = math.rsqrt %25 : vector<32x1xf32>
    %27 = vector.broadcast %26 : vector<32x1xf32> to vector<32x128xf32>
    %28 = arith.mulf %16, %27 : vector<32x128xf32>
    %c0_5 = arith.constant 0 : index
    %c0_6 = arith.constant 0 : index
    %29 = vector.load %arg5[%c0_5, %c0_6] : memref<1x128xf32, #tpu.memory_space<vmem>>, vector<1x128xf32>
    %30 = vector.broadcast %29 : vector<1x128xf32> to vector<32x128xf32>
    %31 = arith.mulf %28, %30 : vector<32x128xf32>
    %c0_7 = arith.constant 0 : index
    %c0_8 = arith.constant 0 : index
    %32 = vector.load %arg6[%c0_7, %c0_8] : memref<1x128xf32, #tpu.memory_space<vmem>>, vector<1x128xf32>
    %33 = vector.broadcast %32 : vector<1x128xf32> to vector<32x128xf32>
    %34 = arith.addf %31, %33 : vector<32x128xf32>
    %35 = arith.truncf %34 : vector<32x128xf32> to vector<32x128xbf16>
    %c0_9 = arith.constant 0 : index
    %c0_10 = arith.constant 0 : index
    %36 = vector.load %arg7[%c0_9, %c0_10] : memref<128x128xbf16, #tpu.memory_space<vmem>>, vector<128x128xbf16>
    %cst_11 = arith.constant dense<0.000000e+00> : vector<32x128xf32>
    %37 = tpu.matmul %35, %36, %cst_11 {dimension_numbers = #tpu.dot_dimension_numbers<[1], [0], [0], [1], [0, 0, 1, 1], [], []>} : vector<32x128xbf16>, vector<128x128xbf16>, vector<32x128xf32> -> vector<32x128xf32>
    %c0_12 = arith.constant 0 : index
    %c0_13 = arith.constant 0 : index
    %38 = vector.load %arg8[%c0_12, %c0_13] : memref<1x128xf32, #tpu.memory_space<vmem>>, vector<1x128xf32>
    %39 = vector.broadcast %38 : vector<1x128xf32> to vector<32x128xf32>
    %40 = arith.addf %37, %39 : vector<32x128xf32>
    %cst_14 = arith.constant 0.000000e+00 : f32
    %41 = vector.broadcast %cst_14 : f32 to vector<32x128xf32>
    %42 = arith.maximumf %40, %41 : vector<32x128xf32>
    %cst_15 = arith.constant dense<0.000000e+00> : vector<32xf32>
    %43 = vector.multi_reduction <add>, %42, %cst_15 [1] : vector<32x128xf32> to vector<32xf32>
    %44 = vector.shape_cast %43 : vector<32xf32> to vector<32x1xf32>
    %cst_16 = arith.constant 1.562500e-02 : f32
    %45 = vector.broadcast %cst_16 : f32 to vector<32x1xf32>
    %46 = arith.mulf %44, %45 : vector<32x1xf32>
    %47 = vector.broadcast %46 : vector<32x1xf32> to vector<32x128xf32>
    %48 = arith.subf %42, %47 : vector<32x128xf32>
    %49 = arith.mulf %48, %48 : vector<32x128xf32>
    %50 = vector.broadcast %9 : vector<1x128xf32> to vector<32x128xf32>
    %51 = arith.mulf %49, %50 : vector<32x128xf32>
    %cst_17 = arith.constant dense<0.000000e+00> : vector<32xf32>
    %52 = vector.multi_reduction <add>, %51, %cst_17 [1] : vector<32x128xf32> to vector<32xf32>
    %53 = vector.shape_cast %52 : vector<32xf32> to vector<32x1xf32>
    %cst_18 = arith.constant 1.562500e-02 : f32
    %54 = vector.broadcast %cst_18 : f32 to vector<32x1xf32>
    %55 = arith.mulf %53, %54 : vector<32x1xf32>
    %cst_19 = arith.constant 9.99999974E-6 : f32
    %56 = vector.broadcast %cst_19 : f32 to vector<32x1xf32>
    %57 = arith.addf %55, %56 : vector<32x1xf32>
    %58 = math.rsqrt %57 : vector<32x1xf32>
    %59 = vector.broadcast %58 : vector<32x1xf32> to vector<32x128xf32>
    %60 = arith.mulf %48, %59 : vector<32x128xf32>
    %c0_20 = arith.constant 0 : index
    %c0_21 = arith.constant 0 : index
    %61 = vector.load %arg9[%c0_20, %c0_21] : memref<1x128xf32, #tpu.memory_space<vmem>>, vector<1x128xf32>
    %62 = vector.broadcast %61 : vector<1x128xf32> to vector<32x128xf32>
    %63 = arith.mulf %60, %62 : vector<32x128xf32>
    %c0_22 = arith.constant 0 : index
    %c0_23 = arith.constant 0 : index
    %64 = vector.load %arg10[%c0_22, %c0_23] : memref<1x128xf32, #tpu.memory_space<vmem>>, vector<1x128xf32>
    %65 = vector.broadcast %64 : vector<1x128xf32> to vector<32x128xf32>
    %66 = arith.addf %63, %65 : vector<32x128xf32>
    %67 = arith.truncf %66 : vector<32x128xf32> to vector<32x128xbf16>
    %c0_24 = arith.constant 0 : index
    %c0_25 = arith.constant 0 : index
    %68 = vector.load %arg11[%c0_24, %c0_25] : memref<128x128xbf16, #tpu.memory_space<vmem>>, vector<128x128xbf16>
    %cst_26 = arith.constant dense<0.000000e+00> : vector<32x128xf32>
    %69 = tpu.matmul %67, %68, %cst_26 {dimension_numbers = #tpu.dot_dimension_numbers<[1], [0], [0], [1], [0, 0, 1, 1], [], []>} : vector<32x128xbf16>, vector<128x128xbf16>, vector<32x128xf32> -> vector<32x128xf32>
    %c0_27 = arith.constant 0 : index
    %c0_28 = arith.constant 0 : index
    %70 = vector.load %arg12[%c0_27, %c0_28] : memref<1x128xf32, #tpu.memory_space<vmem>>, vector<1x128xf32>
    %71 = vector.broadcast %70 : vector<1x128xf32> to vector<32x128xf32>
    %72 = arith.addf %69, %71 : vector<32x128xf32>
    %cst_29 = arith.constant 0.000000e+00 : f32
    %73 = vector.broadcast %cst_29 : f32 to vector<32x128xf32>
    %74 = arith.maximumf %72, %73 : vector<32x128xf32>
    %cst_30 = arith.constant dense<0.000000e+00> : vector<32xf32>
    %75 = vector.multi_reduction <add>, %74, %cst_30 [1] : vector<32x128xf32> to vector<32xf32>
    %76 = vector.shape_cast %75 : vector<32xf32> to vector<32x1xf32>
    %cst_31 = arith.constant 1.562500e-02 : f32
    %77 = vector.broadcast %cst_31 : f32 to vector<32x1xf32>
    %78 = arith.mulf %76, %77 : vector<32x1xf32>
    %79 = vector.broadcast %78 : vector<32x1xf32> to vector<32x128xf32>
    %80 = arith.subf %74, %79 : vector<32x128xf32>
    %81 = arith.mulf %80, %80 : vector<32x128xf32>
    %82 = vector.broadcast %9 : vector<1x128xf32> to vector<32x128xf32>
    %83 = arith.mulf %81, %82 : vector<32x128xf32>
    %cst_32 = arith.constant dense<0.000000e+00> : vector<32xf32>
    %84 = vector.multi_reduction <add>, %83, %cst_32 [1] : vector<32x128xf32> to vector<32xf32>
    %85 = vector.shape_cast %84 : vector<32xf32> to vector<32x1xf32>
    %cst_33 = arith.constant 1.562500e-02 : f32
    %86 = vector.broadcast %cst_33 : f32 to vector<32x1xf32>
    %87 = arith.mulf %85, %86 : vector<32x1xf32>
    %cst_34 = arith.constant 9.99999974E-6 : f32
    %88 = vector.broadcast %cst_34 : f32 to vector<32x1xf32>
    %89 = arith.addf %87, %88 : vector<32x1xf32>
    %90 = math.rsqrt %89 : vector<32x1xf32>
    %91 = vector.broadcast %90 : vector<32x1xf32> to vector<32x128xf32>
    %92 = arith.mulf %80, %91 : vector<32x128xf32>
    %c0_35 = arith.constant 0 : index
    %c0_36 = arith.constant 0 : index
    %93 = vector.load %arg13[%c0_35, %c0_36] : memref<1x128xf32, #tpu.memory_space<vmem>>, vector<1x128xf32>
    %94 = vector.broadcast %93 : vector<1x128xf32> to vector<32x128xf32>
    %95 = arith.mulf %92, %94 : vector<32x128xf32>
    %c0_37 = arith.constant 0 : index
    %c0_38 = arith.constant 0 : index
    %96 = vector.load %arg14[%c0_37, %c0_38] : memref<1x128xf32, #tpu.memory_space<vmem>>, vector<1x128xf32>
    %97 = vector.broadcast %96 : vector<1x128xf32> to vector<32x128xf32>
    %98 = arith.addf %95, %97 : vector<32x128xf32>
    %c0_39 = arith.constant 0 : index
    %c0_40 = arith.constant 0 : index
    %99 = vector.load %arg2[%c0_39, %c0_40] : memref<32x128xf32, #tpu.memory_space<vmem>>, vector<32x128xf32>
    %c0_41 = arith.constant 0 : index
    %c0_42 = arith.constant 0 : index
    %100 = vector.load %arg3[%c0_41, %c0_42] : memref<32x1xf32, #tpu.memory_space<vmem>>, vector<32x1xf32>
    %101 = vector.broadcast %100 : vector<32x1xf32> to vector<32x128xf32>
    %102 = arith.mulf %99, %101 : vector<32x128xf32>
    %103 = arith.truncf %98 : vector<32x128xf32> to vector<32x128xbf16>
    %c0_43 = arith.constant 0 : index
    %c0_44 = arith.constant 0 : index
    %104 = vector.load %arg15[%c0_43, %c0_44] : memref<128x512xbf16, #tpu.memory_space<vmem>>, vector<128x512xbf16>
    %cst_45 = arith.constant dense<0.000000e+00> : vector<32x512xf32>
    %105 = tpu.matmul %103, %104, %cst_45 {dimension_numbers = #tpu.dot_dimension_numbers<[1], [0], [0], [1], [0, 0, 1, 1], [], []>} : vector<32x128xbf16>, vector<128x512xbf16>, vector<32x512xf32> -> vector<32x512xf32>
    %106 = arith.truncf %102 : vector<32x128xf32> to vector<32x128xbf16>
    %c0_46 = arith.constant 0 : index
    %c0_47 = arith.constant 0 : index
    %107 = vector.load %arg16[%c0_46, %c0_47] : memref<128x512xbf16, #tpu.memory_space<vmem>>, vector<128x512xbf16>
    %cst_48 = arith.constant dense<0.000000e+00> : vector<32x512xf32>
    %108 = tpu.matmul %106, %107, %cst_48 {dimension_numbers = #tpu.dot_dimension_numbers<[1], [0], [0], [1], [0, 0, 1, 1], [], []>} : vector<32x128xbf16>, vector<128x512xbf16>, vector<32x512xf32> -> vector<32x512xf32>
    %109 = arith.addf %105, %108 : vector<32x512xf32>
    %c0_49 = arith.constant 0 : index
    %c0_50 = arith.constant 0 : index
    %110 = vector.load %arg17[%c0_49, %c0_50] : memref<1x512xf32, #tpu.memory_space<vmem>>, vector<1x512xf32>
    %111 = vector.broadcast %110 : vector<1x512xf32> to vector<32x512xf32>
    %112 = arith.addf %109, %111 : vector<32x512xf32>
    %113 = vector.extract_strided_slice %112 {offsets = [0, 0], sizes = [32, 128], strides = [1, 1]} : vector<32x512xf32> to vector<32x128xf32>
    %114 = arith.negf %113 : vector<32x128xf32>
    %115 = math.exp %114 : vector<32x128xf32>
    %cst_51 = arith.constant 1.000000e+00 : f32
    %116 = vector.broadcast %cst_51 : f32 to vector<32x128xf32>
    %117 = arith.addf %116, %115 : vector<32x128xf32>
    %118 = arith.divf %116, %117 : vector<32x128xf32>
    %119 = vector.extract_strided_slice %112 {offsets = [0, 128], sizes = [32, 128], strides = [1, 1]} : vector<32x512xf32> to vector<32x128xf32>
    %120 = arith.negf %119 : vector<32x128xf32>
    %121 = math.exp %120 : vector<32x128xf32>
    %cst_52 = arith.constant 1.000000e+00 : f32
    %122 = vector.broadcast %cst_52 : f32 to vector<32x128xf32>
    %123 = arith.addf %122, %121 : vector<32x128xf32>
    %124 = arith.divf %122, %123 : vector<32x128xf32>
    %125 = vector.extract_strided_slice %112 {offsets = [0, 256], sizes = [32, 128], strides = [1, 1]} : vector<32x512xf32> to vector<32x128xf32>
    %126 = vector.extract_strided_slice %112 {offsets = [0, 384], sizes = [32, 128], strides = [1, 1]} : vector<32x512xf32> to vector<32x128xf32>
    %127 = arith.mulf %118, %126 : vector<32x128xf32>
    %128 = arith.addf %125, %127 : vector<32x128xf32>
    %129 = math.tanh %128 : vector<32x128xf32>
    %cst_53 = arith.constant 1.000000e+00 : f32
    %130 = vector.broadcast %cst_53 : f32 to vector<32x128xf32>
    %131 = arith.subf %130, %124 : vector<32x128xf32>
    %132 = arith.mulf %131, %129 : vector<32x128xf32>
    %133 = arith.mulf %124, %102 : vector<32x128xf32>
    %134 = arith.addf %132, %133 : vector<32x128xf32>
    %c0_54 = arith.constant 0 : index
    %c0_55 = arith.constant 0 : index
    %135 = vector.load %arg23[%c0_54, %c0_55] : memref<32x128xf32, #tpu.memory_space<vmem>>, vector<32x128xf32>
    tpu.vector_store %arg23[%c0_54, %c0_55], %134 {strides = array<i32>} : memref<32x128xf32, #tpu.memory_space<vmem>>, vector<32x128xf32>,
    %cst_56 = arith.constant dense<0.000000e+00> : vector<32xf32>
    %136 = vector.multi_reduction <add>, %134, %cst_56 [1] : vector<32x128xf32> to vector<32xf32>
    %137 = vector.shape_cast %136 : vector<32xf32> to vector<32x1xf32>
    %cst_57 = arith.constant 1.562500e-02 : f32
    %138 = vector.broadcast %cst_57 : f32 to vector<32x1xf32>
    %139 = arith.mulf %137, %138 : vector<32x1xf32>
    %140 = vector.broadcast %139 : vector<32x1xf32> to vector<32x128xf32>
    %141 = arith.subf %134, %140 : vector<32x128xf32>
    %142 = arith.mulf %141, %141 : vector<32x128xf32>
    %143 = vector.broadcast %9 : vector<1x128xf32> to vector<32x128xf32>
    %144 = arith.mulf %142, %143 : vector<32x128xf32>
    %cst_58 = arith.constant dense<0.000000e+00> : vector<32xf32>
    %145 = vector.multi_reduction <add>, %144, %cst_58 [1] : vector<32x128xf32> to vector<32xf32>
    %146 = vector.shape_cast %145 : vector<32xf32> to vector<32x1xf32>
    %cst_59 = arith.constant 1.562500e-02 : f32
    %147 = vector.broadcast %cst_59 : f32 to vector<32x1xf32>
    %148 = arith.mulf %146, %147 : vector<32x1xf32>
    %cst_60 = arith.constant 9.99999974E-6 : f32
    %149 = vector.broadcast %cst_60 : f32 to vector<32x1xf32>
    %150 = arith.addf %148, %149 : vector<32x1xf32>
    %151 = math.rsqrt %150 : vector<32x1xf32>
    %152 = vector.broadcast %151 : vector<32x1xf32> to vector<32x128xf32>
    %153 = arith.mulf %141, %152 : vector<32x128xf32>
    %c0_61 = arith.constant 0 : index
    %c0_62 = arith.constant 0 : index
    %154 = vector.load %arg18[%c0_61, %c0_62] : memref<1x128xf32, #tpu.memory_space<vmem>>, vector<1x128xf32>
    %155 = vector.broadcast %154 : vector<1x128xf32> to vector<32x128xf32>
    %156 = arith.mulf %153, %155 : vector<32x128xf32>
    %c0_63 = arith.constant 0 : index
    %c0_64 = arith.constant 0 : index
    %157 = vector.load %arg19[%c0_63, %c0_64] : memref<1x128xf32, #tpu.memory_space<vmem>>, vector<1x128xf32>
    %158 = vector.broadcast %157 : vector<1x128xf32> to vector<32x128xf32>
    %159 = arith.addf %156, %158 : vector<32x128xf32>
    %160 = arith.truncf %159 : vector<32x128xf32> to vector<32x128xbf16>
    %c0_65 = arith.constant 0 : index
    %c0_66 = arith.constant 0 : index
    %161 = vector.load %arg20[%c0_65, %c0_66] : memref<128x128xbf16, #tpu.memory_space<vmem>>, vector<128x128xbf16>
    %cst_67 = arith.constant dense<0.000000e+00> : vector<32x128xf32>
    %162 = tpu.matmul %160, %161, %cst_67 {dimension_numbers = #tpu.dot_dimension_numbers<[1], [0], [0], [1], [0, 0, 1, 1], [], []>} : vector<32x128xbf16>, vector<128x128xbf16>, vector<32x128xf32> -> vector<32x128xf32>
    %c0_68 = arith.constant 0 : index
    %c0_69 = arith.constant 0 : index
    %163 = vector.load %arg21[%c0_68, %c0_69] : memref<1x128xf32, #tpu.memory_space<vmem>>, vector<1x128xf32>
    %164 = vector.broadcast %163 : vector<1x128xf32> to vector<32x128xf32>
    %165 = arith.addf %162, %164 : vector<32x128xf32>
    %166 = tpu.iota {dimensions = array<i32: 1>} : vector<32x128xi32>
    %c8_i32 = arith.constant 8 : i32
    %167 = vector.broadcast %c8_i32 : i32 to vector<32x128xi32>
    %168 = arith.cmpi slt, %166, %167 : vector<32x128xi32>
    %c0_70 = arith.constant 0 : index
    %c0_71 = arith.constant 0 : index
    %169 = vector.load %arg4[%c0_70, %c0_71] : memref<32x128xi8, #tpu.memory_space<vmem>>, vector<32x128xi8>
    %c0_i8 = arith.constant 0 : i8
    %170 = vector.broadcast %c0_i8 : i8 to vector<32x128xi8>
    %171 = arith.cmpi ne, %169, %170 : vector<32x128xi8>
    %cst_72 = arith.constant -1.000000e+10 : f32
    %172 = vector.broadcast %cst_72 : f32 to vector<32x128xf32>
    %173 = arith.select %171, %165, %172 : vector<32x128xi1>, vector<32x128xf32>
    %cst_73 = arith.constant -1.000000e+30 : f32
    %174 = vector.broadcast %cst_73 : f32 to vector<32x128xf32>
    %175 = arith.select %168, %173, %174 : vector<32x128xi1>, vector<32x128xf32>
    %cst_74 = arith.constant dense<0xFF800000> : vector<32xf32>
    %176 = vector.multi_reduction <maximumf>, %175, %cst_74 [1] : vector<32x128xf32> to vector<32xf32>
    %177 = vector.shape_cast %176 : vector<32xf32> to vector<32x1xf32>
    %178 = vector.broadcast %177 : vector<32x1xf32> to vector<32x128xf32>
    %179 = arith.subf %175, %178 : vector<32x128xf32>
    %180 = math.exp %179 : vector<32x128xf32>
    %cst_75 = arith.constant dense<0.000000e+00> : vector<32xf32>
    %181 = vector.multi_reduction <add>, %180, %cst_75 [1] : vector<32x128xf32> to vector<32xf32>
    %182 = vector.shape_cast %181 : vector<32xf32> to vector<32x1xf32>
    %183 = math.log %182 : vector<32x1xf32>
    %184 = arith.addf %177, %183 : vector<32x1xf32>
    %185 = vector.broadcast %177 : vector<32x1xf32> to vector<32x128xf32>
    %186 = arith.cmpf oge, %175, %185 : vector<32x128xf32>
    %c128_i32 = arith.constant 128 : i32
    %187 = vector.broadcast %c128_i32 : i32 to vector<32x128xi32>
    %188 = arith.select %186, %166, %187 : vector<32x128xi1>, vector<32x128xi32>
    %cst_76 = arith.constant dense<2147483647> : vector<32xi32>
    %189 = vector.multi_reduction <minsi>, %188, %cst_76 [1] : vector<32x128xi32> to vector<32xi32>
    %190 = vector.shape_cast %189 : vector<32xi32> to vector<32x1xi32>
    %191 = arith.sitofp %190 : vector<32x1xi32> to vector<32x1xf32>
    %192 = arith.subf %177, %184 : vector<32x1xf32>
    %c0_i32 = arith.constant 0 : i32
    %193 = vector.broadcast %c0_i32 : i32 to vector<32x128xi32>
    %194 = arith.cmpi eq, %166, %193 : vector<32x128xi32>
    %c1_i32 = arith.constant 1 : i32
    %195 = vector.broadcast %c1_i32 : i32 to vector<32x128xi32>
    %196 = arith.cmpi eq, %166, %195 : vector<32x128xi32>
    %cst_77 = arith.constant 0.000000e+00 : f32
    %197 = vector.shape_cast %192 : vector<32x1xf32> to vector<32x1xf32>
    %198 = vector.broadcast %197 : vector<32x1xf32> to vector<32x128xf32>
    %199 = vector.broadcast %cst_77 : f32 to vector<32x128xf32>
    %200 = arith.select %196, %198, %199 : vector<32x128xi1>, vector<32x128xf32>
    %201 = vector.shape_cast %191 : vector<32x1xf32> to vector<32x1xf32>
    %202 = vector.broadcast %201 : vector<32x1xf32> to vector<32x128xf32>
    %203 = arith.select %194, %202, %200 : vector<32x128xi1>, vector<32x128xf32>
    %c0_78 = arith.constant 0 : index
    %c0_79 = arith.constant 0 : index
    %204 = vector.load %arg22[%c0_78, %c0_79] : memref<32x128xf32, #tpu.memory_space<vmem>>, vector<32x128xf32>
    tpu.vector_store %arg22[%c0_78, %c0_79], %203 {strides = array<i32>} : memref<32x128xf32, #tpu.memory_space<vmem>>, vector<32x128xf32>,
    return
  }
  func.func @transform_0(%arg0: i32) -> (i32, i32) {
    %c0_i32 = arith.constant 0 : i32
    %c0_i32_0 = arith.constant 0 : i32
    return %arg0, %c0_i32 : i32, i32
  }
  func.func @transform_1(%arg0: i32) -> (i32, i32) {
    %c0_i32 = arith.constant 0 : i32
    %c0_i32_0 = arith.constant 0 : i32
    return %arg0, %c0_i32 : i32, i32
  }
  func.func @transform_2(%arg0: i32) -> (i32, i32) {
    %c0_i32 = arith.constant 0 : i32
    %c0_i32_0 = arith.constant 0 : i32
    return %arg0, %c0_i32 : i32, i32
  }
  func.func @transform_3(%arg0: i32) -> (i32, i32) {
    %c0_i32 = arith.constant 0 : i32
    %c0_i32_0 = arith.constant 0 : i32
    return %arg0, %c0_i32 : i32, i32
  }
  func.func @transform_4(%arg0: i32) -> (i32, i32) {
    %c0_i32 = arith.constant 0 : i32
    %c0_i32_0 = arith.constant 0 : i32
    %c0_i32_1 = arith.constant 0 : i32
    return %c0_i32, %c0_i32_0 : i32, i32
  }
  func.func @transform_5(%arg0: i32) -> (i32, i32) {
    %c0_i32 = arith.constant 0 : i32
    %c0_i32_0 = arith.constant 0 : i32
    %c0_i32_1 = arith.constant 0 : i32
    return %c0_i32, %c0_i32_0 : i32, i32
  }
  func.func @transform_6(%arg0: i32) -> (i32, i32) {
    %c0_i32 = arith.constant 0 : i32
    %c0_i32_0 = arith.constant 0 : i32
    %c0_i32_1 = arith.constant 0 : i32
    return %c0_i32, %c0_i32_0 : i32, i32
  }
  func.func @transform_7(%arg0: i32) -> (i32, i32) {
    %c0_i32 = arith.constant 0 : i32
    %c0_i32_0 = arith.constant 0 : i32
    %c0_i32_1 = arith.constant 0 : i32
    return %c0_i32, %c0_i32_0 : i32, i32
  }
  func.func @transform_8(%arg0: i32) -> (i32, i32) {
    %c0_i32 = arith.constant 0 : i32
    %c0_i32_0 = arith.constant 0 : i32
    %c0_i32_1 = arith.constant 0 : i32
    return %c0_i32, %c0_i32_0 : i32, i32
  }
  func.func @transform_9(%arg0: i32) -> (i32, i32) {
    %c0_i32 = arith.constant 0 : i32
    %c0_i32_0 = arith.constant 0 : i32
    %c0_i32_1 = arith.constant 0 : i32
    return %c0_i32, %c0_i32_0 : i32, i32
  }
  func.func @transform_10(%arg0: i32) -> (i32, i32) {
    %c0_i32 = arith.constant 0 : i32
    %c0_i32_0 = arith.constant 0 : i32
    %c0_i32_1 = arith.constant 0 : i32
    return %c0_i32, %c0_i32_0 : i32, i32
  }
  func.func @transform_11(%arg0: i32) -> (i32, i32) {
    %c0_i32 = arith.constant 0 : i32
    %c0_i32_0 = arith.constant 0 : i32
    %c0_i32_1 = arith.constant 0 : i32
    return %c0_i32, %c0_i32_0 : i32, i32
  }
  func.func @transform_12(%arg0: i32) -> (i32, i32) {
    %c0_i32 = arith.constant 0 : i32
    %c0_i32_0 = arith.constant 0 : i32
    %c0_i32_1 = arith.constant 0 : i32
    return %c0_i32, %c0_i32_0 : i32, i32
  }
  func.func @transform_13(%arg0: i32) -> (i32, i32) {
    %c0_i32 = arith.constant 0 : i32
    %c0_i32_0 = arith.constant 0 : i32
    %c0_i32_1 = arith.constant 0 : i32
    return %c0_i32, %c0_i32_0 : i32, i32
  }
  func.func @transform_14(%arg0: i32) -> (i32, i32) {
    %c0_i32 = arith.constant 0 : i32
    %c0_i32_0 = arith.constant 0 : i32
    %c0_i32_1 = arith.constant 0 : i32
    return %c0_i32, %c0_i32_0 : i32, i32
  }
  func.func @transform_15(%arg0: i32) -> (i32, i32) {
    %c0_i32 = arith.constant 0 : i32
    %c0_i32_0 = arith.constant 0 : i32
    %c0_i32_1 = arith.constant 0 : i32
    return %c0_i32, %c0_i32_0 : i32, i32
  }
  func.func @transform_16(%arg0: i32) -> (i32, i32) {
    %c0_i32 = arith.constant 0 : i32
    %c0_i32_0 = arith.constant 0 : i32
    %c0_i32_1 = arith.constant 0 : i32
    return %c0_i32, %c0_i32_0 : i32, i32
  }
  func.func @transform_17(%arg0: i32) -> (i32, i32) {
    %c0_i32 = arith.constant 0 : i32
    %c0_i32_0 = arith.constant 0 : i32
    %c0_i32_1 = arith.constant 0 : i32
    return %c0_i32, %c0_i32_0 : i32, i32
  }
  func.func @transform_18(%arg0: i32) -> (i32, i32) {
    %c0_i32 = arith.constant 0 : i32
    %c0_i32_0 = arith.constant 0 : i32
    %c0_i32_1 = arith.constant 0 : i32
    return %c0_i32, %c0_i32_0 : i32, i32
  }
  func.func @transform_19(%arg0: i32) -> (i32, i32) {
    %c0_i32 = arith.constant 0 : i32
    %c0_i32_0 = arith.constant 0 : i32
    %c0_i32_1 = arith.constant 0 : i32
    return %c0_i32, %c0_i32_0 : i32, i32
  }
  func.func @transform_20(%arg0: i32) -> (i32, i32) {
    %c0_i32 = arith.constant 0 : i32
    %c0_i32_0 = arith.constant 0 : i32
    %c0_i32_1 = arith.constant 0 : i32
    return %c0_i32, %c0_i32_0 : i32, i32
  }
  func.func @transform_21(%arg0: i32) -> (i32, i32) {
    %c0_i32 = arith.constant 0 : i32
    %c0_i32_0 = arith.constant 0 : i32
    return %arg0, %c0_i32 : i32, i32
  }
  func.func @transform_22(%arg0: i32) -> (i32, i32) {
    %c0_i32 = arith.constant 0 : i32
    %c0_i32_0 = arith.constant 0 : i32
    return %arg0, %c0_i32 : i32, i32
  }
}

</mosaic_0001>

<llo_original>
// kernel: tpu_custom_call.1
$region0: #{tpu_custom_call.1}
  #allocation0 [shape = 'u32[]', space=smem, size = 0x4, offset = 0x4, fixed_abs, tag = 'smem constant byte address 0x4 - core index']
  #allocation1 [shape = 'u32[144,128]{1,0:T(1,128)}', space=vmem, size = 0x12000, scoped, tag = 'internal scratch']
  %s0 = inlined_call_operand.hbm [shape: f32[32,128], index: 0, kind: input, shape index: {}]
  %s1 = inlined_call_operand.hbm [shape: f32[32,128], index: 1, kind: input, shape index: {}]
  %s2 = inlined_call_operand.vmem [shape: f32[32,1], index: 2, kind: input, shape index: {}]
  %s3 = inlined_call_operand.hbm [shape: s8[32,128], index: 3, kind: input, shape index: {}]
  %s4 = inlined_call_operand.vmem [shape: f32[1,128], index: 4, kind: input, shape index: {}]
  %s5 = inlined_call_operand.vmem [shape: f32[1,128], index: 5, kind: input, shape index: {}]
  %s6 = inlined_call_operand.hbm [shape: bf16[128,128], index: 6, kind: input, shape index: {}]
  %s7 = inlined_call_operand.hbm [shape: f32[1,128], index: 7, kind: input, shape index: {}]
  %s8 = inlined_call_operand.hbm [shape: f32[1,128], index: 8, kind: input, shape index: {}]
  %s9 = inlined_call_operand.hbm [shape: f32[1,128], index: 9, kind: input, shape index: {}]
  %s10 = inlined_call_operand.vmem [shape: bf16[128,128], index: 10, kind: input, shape index: {}]
  %s11 = inlined_call_operand.vmem [shape: f32[1,128], index: 11, kind: input, shape index: {}]
  %s12 = inlined_call_operand.vmem [shape: f32[1,128], index: 12, kind: input, shape index: {}]
  %s13 = inlined_call_operand.vmem [shape: f32[1,128], index: 13, kind: input, shape index: {}]
  %s14 = inlined_call_operand.hbm [shape: bf16[128,512], index: 14, kind: input, shape index: {}]
  %s15 = inlined_call_operand.hbm [shape: bf16[128,512], index: 15, kind: input, shape index: {}]
  %s16 = inlined_call_operand.vmem [shape: f32[1,512], index: 16, kind: input, shape index: {}]
  %s17 = inlined_call_operand.vmem [shape: f32[1,128], index: 17, kind: input, shape index: {}]
  %s18 = inlined_call_operand.vmem [shape: f32[1,128], index: 18, kind: input, shape index: {}]
  %s19 = inlined_call_operand.hbm [shape: bf16[128,128], index: 19, kind: input, shape index: {}]
  %s20 = inlined_call_operand.vmem [shape: f32[1,128], index: 20, kind: input, shape index: {}]
  %s21 = inlined_call_operand.hbm [shape: f32[32,128], index: 21, kind: output, shape index: {0}]
  %s22 = inlined_call_operand.hbm [shape: f32[32,128], index: 22, kind: output, shape index: {1}]
  %23 = xla_tuple %s21, %s22
  %s24 = sld [smem:[#allocation0]]
  $region142: #{tpu_custom_call.1} parent=0
    _
  %s26 = ssub.s32 1, %s24
  %s27 = scalar_select 0, %s26, %s24
  $region1: #{tpu_custom_call.1} parent=0
    #allocation2 [shape = 'u8[16384]{0}', space=vmem, size = 0x4000, scoped, tag = 'input window, operand 0, single buffered']
    #allocation3 [shape = 's32[1]{0}', space=sflag, size = 0x4, scoped, tag = 'scoped memory for tpu_custom_call.1']
    #allocation4 [shape = 's32[1]{0}', space=sflag, size = 0x4, scoped, tag = 'scoped memory for tpu_custom_call.1']
    #allocation5 [shape = 'u8[16384]{0}', space=vmem, size = 0x4000, scoped, tag = 'input window, operand 1, single buffered']
    #allocation6 [shape = 's32[1]{0}', space=sflag, size = 0x4, scoped, tag = 'scoped memory for tpu_custom_call.1']
    #allocation7 [shape = 'u8[4096]{0}', space=vmem, size = 0x1000, scoped, tag = 'input window, operand 3, single buffered']
    #allocation8 [shape = 'u8[32768]{0}', space=vmem, size = 0x8000, scoped, tag = 'input window, operand 6, single buffered']
    #allocation9 [shape = 's32[1]{0}', space=sflag, size = 0x4, scoped, tag = 'scoped memory for tpu_custom_call.1']
    #allocation10 [shape = 'u8[512]{0}', space=vmem, size = 0x400, scoped, tag = 'input window, operand 7, single buffered']
    #allocation11 [shape = 'u8[512]{0}', space=vmem, size = 0x400, scoped, tag = 'input window, operand 8, single buffered']
    #allocation12 [shape = 's32[1]{0}', space=sflag, size = 0x4, scoped, tag = 'scoped memory for tpu_custom_call.1']
    #allocation13 [shape = 'u8[512]{0}', space=vmem, size = 0x400, scoped, tag = 'input window, operand 9, single buffered']
    #allocation14 [shape = 'u8[131072]{0}', space=vmem, size = 0x20000, scoped, tag = 'input window, operand 14, single buffered']
    #allocation15 [shape = 's32[1]{0}', space=sflag, size = 0x4, scoped, tag = 'scoped memory for tpu_custom_call.1']
    #allocation16 [shape = 'u8[131072]{0}', space=vmem, size = 0x20000, scoped, tag = 'input window, operand 15, single buffered']
    #allocation17 [shape = 'u8[32768]{0}', space=vmem, size = 0x8000, scoped, tag = 'input window, operand 19, single buffered']
    #allocation18 [shape = 's32[1]{0}', space=sflag, size = 0x4, scoped, tag = 'scoped memory for tpu_custom_call.1']
    #allocation19 [shape = 'u8[16384]{0}', space=vmem, size = 0x4000, scoped, tag = 'output window, operand 0, single buffered']
    #allocation20 [shape = 'u8[16384]{0}', space=vmem, size = 0x4000, scoped, tag = 'output window, operand 1, single buffered']
    #allocation21 [shape = 's32[1]{0}', space=sflag, size = 0x4, scoped, tag = 'scoped memory for tpu_custom_call.1']
    %28 = vsyncpa [#allocation3], 0
    %29 = vsyncpa [#allocation6], 0
    %30 = vsyncpa [#allocation9], 0
    %31 = vsyncpa [#allocation12], 0
    %32 = vsyncpa [#allocation15], 0
    %33 = vsyncpa [#allocation18], 0
    %34 = vsyncpa [#allocation4], 0
    %35 = vsyncpa [#allocation21], 0
    // Predicated region
    $region2: #{tpu_custom_call.1} parent=1 // pred_check
      _
    $region3: #{tpu_custom_call.1} parent=1 // pred_check_branch
      %37 = sbr.rel (0) target = $region5
    $region4: #{tpu_custom_call.1} parent=1 // pred_region
      %s39 = ssub.s32 512, 512
      %40 = vsyncadd [#allocation3], %s39
      %s41 = sshll.u32 [#allocation2], 4
      %s42 = int_to_ptr.vmem [resolvable:$true] %s41
      %47 = dma.hbm_to_vmem [thread:$0]  %s0, 512, %s42, [#allocation3], 128, 128, 8
    $region5: #{tpu_custom_call.1} parent=1 // pred_fallthru
      _
    // Predicated region
    $region6: #{tpu_custom_call.1} parent=1 // pred_check
      _
    $region7: #{tpu_custom_call.1} parent=1 // pred_check_branch
      %49 = sbr.rel (0) target = $region9
    $region8: #{tpu_custom_call.1} parent=1 // pred_region
      %s51 = ssub.s32 512, 512
      %52 = vsyncadd [#allocation6], %s51
      %s53 = sshll.u32 [#allocation5], 4
      %s54 = int_to_ptr.vmem [resolvable:$true] %s53
      %59 = dma.hbm_to_vmem [thread:$0]  %s1, 512, %s54, [#allocation6], 128, 128, 8
    $region9: #{tpu_custom_call.1} parent=1 // pred_fallthru
      _
    // Predicated region
    $region10: #{tpu_custom_call.1} parent=1 // pred_check
      _
    $region11: #{tpu_custom_call.1} parent=1 // pred_check_branch
      %61 = sbr.rel (0) target = $region13
    $region12: #{tpu_custom_call.1} parent=1 // pred_region
      _
    $region13: #{tpu_custom_call.1} parent=1 // pred_fallthru
      _
    // Predicated region
    $region14: #{tpu_custom_call.1} parent=1 // pred_check
      _
    $region15: #{tpu_custom_call.1} parent=1 // pred_check_branch
      %63 = sbr.rel (0) target = $region17
    $region16: #{tpu_custom_call.1} parent=1 // pred_region
      %s65 = ssub.s32 128, 128
      %66 = vsyncadd [#allocation6], %s65
      %s68 = sshll.u32 [#allocation7], 4
      %s69 = int_to_ptr.vmem [resolvable:$true] %s68
      %71 = dma.hbm_to_vmem [thread:$0]  %s3, 128, %s69, [#allocation6]
    $region17: #{tpu_custom_call.1} parent=1 // pred_fallthru
      _
    // Predicated region
    $region18: #{tpu_custom_call.1} parent=1 // pred_check
      _
    $region19: #{tpu_custom_call.1} parent=1 // pred_check_branch
      %73 = sbr.rel (0) target = $region21
    $region20: #{tpu_custom_call.1} parent=1 // pred_region
      _
    $region21: #{tpu_custom_call.1} parent=1 // pred_fallthru
      _
    // Predicated region
    $region22: #{tpu_custom_call.1} parent=1 // pred_check
      _
    $region23: #{tpu_custom_call.1} parent=1 // pred_check_branch
      %75 = sbr.rel (0) target = $region25
    $region24: #{tpu_custom_call.1} parent=1 // pred_region
      _
    $region25: #{tpu_custom_call.1} parent=1 // pred_fallthru
      _
    // Predicated region
    $region26: #{tpu_custom_call.1} parent=1 // pred_check
      _
    $region27: #{tpu_custom_call.1} parent=1 // pred_check_branch
      %77 = sbr.rel (0) target = $region29
    $region28: #{tpu_custom_call.1} parent=1 // pred_region
      %s79 = ssub.s32 1024, 1024
      %80 = vsyncadd [#allocation9], %s79
      %s81 = sshll.u32 [#allocation8], 4
      %s82 = int_to_ptr.vmem [resolvable:$true] %s81
      %87 = dma.hbm_to_vmem [thread:$0]  %s6, 1024, %s82, [#allocation9], 64, 64, 4
    $region29: #{tpu_custom_call.1} parent=1 // pred_fallthru
      _
    // Predicated region
    $region30: #{tpu_custom_call.1} parent=1 // pred_check
      _
    $region31: #{tpu_custom_call.1} parent=1 // pred_check_branch
      %89 = sbr.rel (0) target = $region33
    $region32: #{tpu_custom_call.1} parent=1 // pred_region
      %s91 = ssub.s32 16, 16
      %92 = vsyncadd [#allocation9], %s91
      %s94 = sshll.u32 [#allocation10], 4
      %s95 = int_to_ptr.vmem [resolvable:$true] %s94
      %97 = dma.hbm_to_vmem [thread:$0]  %s7, 16, %s95, [#allocation9]
    $region33: #{tpu_custom_call.1} parent=1 // pred_fallthru
      _
    // Predicated region
    $region34: #{tpu_custom_call.1} parent=1 // pred_check
      _
    $region35: #{tpu_custom_call.1} parent=1 // pred_check_branch
      %99 = sbr.rel (0) target = $region37
    $region36: #{tpu_custom_call.1} parent=1 // pred_region
      %s101 = ssub.s32 16, 16
      %102 = vsyncadd [#allocation12], %s101
      %s104 = sshll.u32 [#allocation11], 4
      %s105 = int_to_ptr.vmem [resolvable:$true] %s104
      %107 = dma.hbm_to_vmem [thread:$0]  %s8, 16, %s105, [#allocation12]
    $region37: #{tpu_custom_call.1} parent=1 // pred_fallthru
      _
    // Predicated region
    $region38: #{tpu_custom_call.1} parent=1 // pred_check
      _
    $region39: #{tpu_custom_call.1} parent=1 // pred_check_branch
      %109 = sbr.rel (0) target = $region41
    $region40: #{tpu_custom_call.1} parent=1 // pred_region
      %s111 = ssub.s32 16, 16
      %112 = vsyncadd [#allocation12], %s111
      %s114 = sshll.u32 [#allocation13], 4
      %s115 = int_to_ptr.vmem [resolvable:$true] %s114
      %117 = dma.hbm_to_vmem [thread:$0]  %s9, 16, %s115, [#allocation12]
    $region41: #{tpu_custom_call.1} parent=1 // pred_fallthru
      _
    // Predicated region
    $region42: #{tpu_custom_call.1} parent=1 // pred_check
      _
    $region43: #{tpu_custom_call.1} parent=1 // pred_check_branch
      %119 = sbr.rel (0) target = $region45
    $region44: #{tpu_custom_call.1} parent=1 // pred_region
      _
    $region45: #{tpu_custom_call.1} parent=1 // pred_fallthru
      _
    // Predicated region
    $region46: #{tpu_custom_call.1} parent=1 // pred_check
      _
    $region47: #{tpu_custom_call.1} parent=1 // pred_check_branch
      %121 = sbr.rel (0) target = $region49
    $region48: #{tpu_custom_call.1} parent=1 // pred_region
      _
    $region49: #{tpu_custom_call.1} parent=1 // pred_fallthru
      _
    // Predicated region
    $region50: #{tpu_custom_call.1} parent=1 // pred_check
      _
    $region51: #{tpu_custom_call.1} parent=1 // pred_check_branch
      %123 = sbr.rel (0) target = $region53
    $region52: #{tpu_custom_call.1} parent=1 // pred_region
      _
    $region53: #{tpu_custom_call.1} parent=1 // pred_fallthru
      _
    // Predicated region
    $region54: #{tpu_custom_call.1} parent=1 // pred_check
      _
    $region55: #{tpu_custom_call.1} parent=1 // pred_check_branch
      %125 = sbr.rel (0) target = $region57
    $region56: #{tpu_custom_call.1} parent=1 // pred_region
      _
    $region57: #{tpu_custom_call.1} parent=1 // pred_fallthru
      _
    // Predicated region
    $region58: #{tpu_custom_call.1} parent=1 // pred_check
      _
    $region59: #{tpu_custom_call.1} parent=1 // pred_check_branch
      %127 = sbr.rel (0) target = $region61
    $region60: #{tpu_custom_call.1} parent=1 // pred_region
      %s129 = ssub.s32 4096, 4096
      %130 = vsyncadd [#allocation15], %s129
      %s131 = sshll.u32 [#allocation14], 4
      %s132 = int_to_ptr.vmem [resolvable:$true] %s131
      %137 = dma.hbm_to_vmem [thread:$0]  %s14, 4096, %s132, [#allocation15], 256, 256, 16
    $region61: #{tpu_custom_call.1} parent=1 // pred_fallthru
      _
    // Predicated region
    $region62: #{tpu_custom_call.1} parent=1 // pred_check
      _
    $region63: #{tpu_custom_call.1} parent=1 // pred_check_branch
      %139 = sbr.rel (0) target = $region65
    $region64: #{tpu_custom_call.1} parent=1 // pred_region
      %s141 = ssub.s32 4096, 4096
      %142 = vsyncadd [#allocation15], %s141
      %s143 = sshll.u32 [#allocation16], 4
      %s144 = int_to_ptr.vmem [resolvable:$true] %s143
      %149 = dma.hbm_to_vmem [thread:$0]  %s15, 4096, %s144, [#allocation15], 256, 256, 16
    $region65: #{tpu_custom_call.1} parent=1 // pred_fallthru
      _
    // Predicated region
    $region66: #{tpu_custom_call.1} parent=1 // pred_check
      _
    $region67: #{tpu_custom_call.1} parent=1 // pred_check_branch
      %151 = sbr.rel (0) target = $region69
    $region68: #{tpu_custom_call.1} parent=1 // pred_region
      _
    $region69: #{tpu_custom_call.1} parent=1 // pred_fallthru
      _
    // Predicated region
    $region70: #{tpu_custom_call.1} parent=1 // pred_check
      _
    $region71: #{tpu_custom_call.1} parent=1 // pred_check_branch
      %153 = sbr.rel (0) target = $region73
    $region72: #{tpu_custom_call.1} parent=1 // pred_region
      _
    $region73: #{tpu_custom_call.1} parent=1 // pred_fallthru
      _
    // Predicated region
    $region74: #{tpu_custom_call.1} parent=1 // pred_check
      _
    $region75: #{tpu_custom_call.1} parent=1 // pred_check_branch
      %155 = sbr.rel (0) target = $region77
    $region76: #{tpu_custom_call.1} parent=1 // pred_region
      _
    $region77: #{tpu_custom_call.1} parent=1 // pred_fallthru
      _
    // Predicated region
    $region78: #{tpu_custom_call.1} parent=1 // pred_check
      _
    $region79: #{tpu_custom_call.1} parent=1 // pred_check_branch
      %157 = sbr.rel (0) target = $region81
    $region80: #{tpu_custom_call.1} parent=1 // pred_region
      %s159 = ssub.s32 1024, 1024
      %160 = vsyncadd [#allocation18], %s159
      %s161 = sshll.u32 [#allocation17], 4
      %s162 = int_to_ptr.vmem [resolvable:$true] %s161
      %167 = dma.hbm_to_vmem [thread:$0]  %s19, 1024, %s162, [#allocation18], 64, 64, 4
    $region81: #{tpu_custom_call.1} parent=1 // pred_fallthru
      _
    // Predicated region
    $region82: #{tpu_custom_call.1} parent=1 // pred_check
      _
    $region83: #{tpu_custom_call.1} parent=1 // pred_check_branch
      %169 = sbr.rel (0) target = $region85
    $region84: #{tpu_custom_call.1} parent=1 // pred_region
      _
    $region85: #{tpu_custom_call.1} parent=1 // pred_fallthru
      _
    // Predicated region
    $region86: #{tpu_custom_call.1} parent=1 // pred_check
      _
    $region87: #{tpu_custom_call.1} parent=1 // pred_check_branch
      %171 = sbr.rel (0) target = $region89
    $region88: #{tpu_custom_call.1} parent=1 // pred_region
      %172 = dma.done [#allocation3], 512
    $region89: #{tpu_custom_call.1} parent=1 // pred_fallthru
      _
    // Predicated region
    $region90: #{tpu_custom_call.1} parent=1 // pred_check
      _
    $region91: #{tpu_custom_call.1} parent=1 // pred_check_branch
      %174 = sbr.rel (0) target = $region93
    $region92: #{tpu_custom_call.1} parent=1 // pred_region
      %175 = dma.done [#allocation6], 512
    $region93: #{tpu_custom_call.1} parent=1 // pred_fallthru
      _
    // Predicated region
    $region94: #{tpu_custom_call.1} parent=1 // pred_check
      _
    $region95: #{tpu_custom_call.1} parent=1 // pred_check_branch
      %177 = sbr.rel (0) target = $region97
    $region96: #{tpu_custom_call.1} parent=1 // pred_region
      %178 = dma.done [#allocation6], 128
    $region97: #{tpu_custom_call.1} parent=1 // pred_fallthru
      _
    // Predicated region
    $region98: #{tpu_custom_call.1} parent=1 // pred_check
      _
    $region99: #{tpu_custom_call.1} parent=1 // pred_check_branch
      %180 = sbr.rel (0) target = $region101
    $region100: #{tpu_custom_call.1} parent=1 // pred_region
      %181 = dma.done [#allocation9], 1024
    $region101: #{tpu_custom_call.1} parent=1 // pred_fallthru
      _
    // Predicated region
    $region102: #{tpu_custom_call.1} parent=1 // pred_check
      _
    $region103: #{tpu_custom_call.1} parent=1 // pred_check_branch
      %183 = sbr.rel (0) target = $region105
    $region104: #{tpu_custom_call.1} parent=1 // pred_region
      %184 = dma.done [#allocation9], 16
    $region105: #{tpu_custom_call.1} parent=1 // pred_fallthru
      _
    // Predicated region
    $region106: #{tpu_custom_call.1} parent=1 // pred_check
      _
    $region107: #{tpu_custom_call.1} parent=1 // pred_check_branch
      %186 = sbr.rel (0) target = $region109
    $region108: #{tpu_custom_call.1} parent=1 // pred_region
      %187 = dma.done [#allocation12], 16
    $region109: #{tpu_custom_call.1} parent=1 // pred_fallthru
      _
    // Predicated region
    $region110: #{tpu_custom_call.1} parent=1 // pred_check
      _
    $region111: #{tpu_custom_call.1} parent=1 // pred_check_branch
      %189 = sbr.rel (0) target = $region113
    $region112: #{tpu_custom_call.1} parent=1 // pred_region
      %190 = dma.done [#allocation12], 16
    $region113: #{tpu_custom_call.1} parent=1 // pred_fallthru
      _
    // Predicated region
    $region114: #{tpu_custom_call.1} parent=1 // pred_check
      _
    $region115: #{tpu_custom_call.1} parent=1 // pred_check_branch
      %192 = sbr.rel (0) target = $region117
    $region116: #{tpu_custom_call.1} parent=1 // pred_region
      %193 = dma.done [#allocation15], 4096
    $region117: #{tpu_custom_call.1} parent=1 // pred_fallthru
      _
    // Predicated region
    $region118: #{tpu_custom_call.1} parent=1 // pred_check
      _
    $region119: #{tpu_custom_call.1} parent=1 // pred_check_branch
      %195 = sbr.rel (0) target = $region121
    $region120: #{tpu_custom_call.1} parent=1 // pred_region
      %196 = dma.done [#allocation15], 4096
    $region121: #{tpu_custom_call.1} parent=1 // pred_fallthru
      _
    // Predicated region
    $region122: #{tpu_custom_call.1} parent=1 // pred_check
      _
    $region123: #{tpu_custom_call.1} parent=1 // pred_check_branch
      %198 = sbr.rel (0) target = $region125
    $region124: #{tpu_custom_call.1} parent=1 // pred_region
      %199 = dma.done [#allocation18], 1024
    $region125: #{tpu_custom_call.1} parent=1 // pred_fallthru
      _
    %v203 = vlaneseq
    %v204 = vand.u32 %v203, 127
    %vm205 = vcmp.lt.s32.totalorder %v204, 112
    %v206 = vsel %vm205, 1, 0
    %v207 = vcvt.s32.f32 %v206
    %vm208 = vcmp.lt.s32.totalorder %v204, 64
    %v209 = vsel %vm208, 1, 0
    %v210 = vcvt.s32.f32 %v209
    %v211 = vld [vmem:[#allocation2] sm:$0xff]
    %v212 = vld [vmem:[#allocation2 + $0x8] sm:$0xff]
    %v213 = vld [vmem:[#allocation2 + $0x10] sm:$0xff]
    %v214 = vld [vmem:[#allocation2 + $0x18] sm:$0xff]
    %215 = vadd.xlane.f32.xlu0 %v211
    %v216 = vpop.xlane.xlu0 %215
    %217 = vadd.xlane.f32.xlu0 %v212
    %v218 = vpop.xlane.xlu0 %217
    %219 = vadd.xlane.f32.xlu0 %v213
    %v220 = vpop.xlane.xlu0 %219
    %221 = vadd.xlane.f32.xlu0 %v214
    %v222 = vpop.xlane.xlu0 %221
    %v223 = vmul.f32 %v216, 0.008928572
    %v224 = vmul.f32 %v218, 0.008928572
    %v225 = vmul.f32 %v220, 0.008928572
    %v226 = vmul.f32 %v222, 0.008928572
    %v227 = vsub.f32 %v211, %v223
    %v228 = vsub.f32 %v212, %v224
    %v229 = vsub.f32 %v213, %v225
    %v230 = vsub.f32 %v214, %v226
    %v231 = vmul.f32 %v227, %v227
    %v232 = vmul.f32 %v228, %v228
    %v233 = vmul.f32 %v229, %v229
    %v234 = vmul.f32 %v230, %v230
    %v235 = vmul.f32 %v231, %v207
    %v236 = vmul.f32 %v232, %v207
    %v237 = vmul.f32 %v233, %v207
    %v238 = vmul.f32 %v234, %v207
    %239 = vadd.xlane.f32.xlu0 %v235
    %v240 = vpop.xlane.xlu0 %239
    %241 = vadd.xlane.f32.xlu0 %v236
    %v242 = vpop.xlane.xlu0 %241
    %243 = vadd.xlane.f32.xlu0 %v237
    %v244 = vpop.xlane.xlu0 %243
    %245 = vadd.xlane.f32.xlu0 %v238
    %v246 = vpop.xlane.xlu0 %245
    %v247 = vmul.f32 %v240, 0.008928572
    %v248 = vmul.f32 %v242, 0.008928572
    %v249 = vmul.f32 %v244, 0.008928572
    %v250 = vmul.f32 %v246, 0.008928572
    %v251 = vadd.f32 %v247, 1e-05
    %v252 = vadd.f32 %v248, 1e-05
    %v253 = vadd.f32 %v249, 1e-05
    %v254 = vadd.f32 %v250, 1e-05
    %v255 = vrsqrt.pop %v251
    %v256 = vrsqrt.pop %v252
    %v257 = vrsqrt.pop %v253
    %v258 = vrsqrt.pop %v254
    %v259 = vmul.f32 %v227, %v255
    %v260 = vmul.f32 %v228, %v256
    %v261 = vmul.f32 %v229, %v257
    %v262 = vmul.f32 %v230, %v258
    %v263 = vld [vmem:[%s4] sm:$0x1]
    %v265 = vlaneseq
    %v266 = vshrl.u32 %v265, 7
    %v267 = vsub.s32 0, %v266
    %v268 = vrot.slane %v263, %v267
    %v270 = vmul.f32 %v259, %v268
    %v271 = vmul.f32 %v260, %v268
    %v272 = vmul.f32 %v261, %v268
    %v273 = vmul.f32 %v262, %v268
    %v274 = vld [vmem:[%s5] sm:$0x1]
    %v276 = vlaneseq
    %v277 = vshrl.u32 %v276, 7
    %v278 = vsub.s32 0, %v277
    %v279 = vrot.slane %v274, %v278
    %v281 = vadd.f32 %v270, %v279
    %v282 = vadd.f32 %v271, %v279
    %v283 = vadd.f32 %v272, %v279
    %v284 = vadd.f32 %v273, %v279
    %v285 = vpack.c.bf16 %v282, %v281
    %v286 = vpack.c.bf16 %v284, %v283
    %v287 = vld [vmem:[#allocation8] sm:$0xf]
    %v288 = vld [vmem:[#allocation8 + $0x4] sm:$0xf]
    %v289 = vld [vmem:[#allocation8 + $0x8] sm:$0xf]
    %v290 = vld [vmem:[#allocation8 + $0xc] sm:$0xf]
    %v291 = vld [vmem:[#allocation8 + $0x10] sm:$0xf]
    %v292 = vld [vmem:[#allocation8 + $0x14] sm:$0xf]
    %v293 = vld [vmem:[#allocation8 + $0x18] sm:$0xf]
    %v294 = vld [vmem:[#allocation8 + $0x1c] sm:$0xf]
    %v295 = vld [vmem:[#allocation8 + $0x20] sm:$0xf]
    %v296 = vld [vmem:[#allocation8 + $0x24] sm:$0xf]
    %v297 = vld [vmem:[#allocation8 + $0x28] sm:$0xf]
    %v298 = vld [vmem:[#allocation8 + $0x2c] sm:$0xf]
    %v299 = vld [vmem:[#allocation8 + $0x30] sm:$0xf]
    %v300 = vld [vmem:[#allocation8 + $0x34] sm:$0xf]
    %v301 = vld [vmem:[#allocation8 + $0x38] sm:$0xf]
    %v302 = vld [vmem:[#allocation8 + $0x3c] sm:$0xf]
    %v303 = vld [vmem:[#allocation10] sm:$0x1]
    %v305 = vlaneseq
    %v306 = vshrl.u32 %v305, 7
    %v307 = vsub.s32 0, %v306
    %v308 = vrot.slane %v303, %v307
    %v326 = vunpack.c.l.b16 %v287
    %v327 = vunpack.c.l.b16 %v288
    %v328 = vunpack.c.l.b16 %v289
    %v329 = vunpack.c.l.b16 %v290
    %v330 = vunpack.c.l.b16 %v291
    %v331 = vunpack.c.l.b16 %v292
    %v332 = vunpack.c.l.b16 %v293
    %v333 = vunpack.c.l.b16 %v294
    %v334 = vunpack.c.l.b16 %v295
    %v335 = vunpack.c.l.b16 %v296
    %v336 = vunpack.c.l.b16 %v297
    %v337 = vunpack.c.l.b16 %v298
    %v338 = vunpack.c.l.b16 %v299
    %v339 = vunpack.c.l.b16 %v300
    %v340 = vunpack.c.l.b16 %v301
    %v341 = vunpack.c.l.b16 %v302
    %v342 = vpack.c.b16 %v327, %v326
    %v343 = vpack.c.b16 %v329, %v328
    %v344 = vpack.c.b16 %v331, %v330
    %v345 = vpack.c.b16 %v333, %v332
    %v346 = vpack.c.b16 %v335, %v334
    %v347 = vpack.c.b16 %v337, %v336
    %v348 = vpack.c.b16 %v339, %v338
    %v349 = vpack.c.b16 %v341, %v340
    %358 = vmatprep.subr.bf16.mxu0 0
    %359 = vmatpush1.bf16.msra.mxu0 %v342
    %360 = vmatprep.subr.bf16.mxu0 0
    %361 = vmatpush1.bf16.msra.mxu0 %v343
    %362 = vmatprep.subr.bf16.mxu0 0
    %363 = vmatpush1.bf16.msra.mxu0 %v344
    %364 = vmatprep.subr.bf16.mxu0 0
    %365 = vmatpush1.bf16.msra.mxu0 %v345
    %366 = vmatprep.subr.bf16.mxu0 0
    %367 = vmatpush1.bf16.msra.mxu0 %v346
    %368 = vmatprep.subr.bf16.mxu0 0
    %369 = vmatpush1.bf16.msra.mxu0 %v347
    %370 = vmatprep.subr.bf16.mxu0 0
    %371 = vmatpush1.bf16.msra.mxu0 %v348
    %372 = vmatprep.subr.bf16.mxu0 0
    %373 = vmatpush1.bf16.msra.mxu0 %v349
    %374 = vmatprep.subr.bf16.mxu0 0
    %375 = vmatpush1.bf16.msra.mxu0 0
    %376 = vmatprep.subr.bf16.mxu0 0
    %377 = vmatpush1.bf16.msra.mxu0 0
    %378 = vmatprep.subr.bf16.mxu0 0
    %379 = vmatpush1.bf16.msra.mxu0 0
    %380 = vmatprep.subr.bf16.mxu0 0
    %381 = vmatpush1.bf16.msra.mxu0 0
    %382 = vmatprep.subr.bf16.mxu0 0
    %383 = vmatpush1.bf16.msra.mxu0 0
    %384 = vmatprep.subr.bf16.mxu0 0
    %385 = vmatpush1.bf16.msra.mxu0 0
    %386 = vmatprep.subr.bf16.mxu0 0
    %387 = vmatpush1.bf16.msra.mxu0 0
    %388 = vmatprep.subr.bf16.mxu0 0
    %389 = vmatpush1.bf16.msra.mxu0 0
    %390 = vmatprep.mubr.bf16.mxu0 0
    %391 = vmatmul.mubr.bf16.gmra.mrb[0].mxu0 %v285
    %v392 = vpop.f32.mrb[0].mxu0
    %v393 = vadd.f32 %v308, %v392
    %v394 = vpop.f32.mrb[0].mxu0
    %v395 = vpop.f32.mrb[0].mxu0
    %v396 = vadd.f32 %v308, %v395
    %v397 = vpop.f32.mrb[0].mxu0
    %398 = vmatprep.mubr.bf16.mxu0 0
    %399 = vmatmul.mubr.bf16.gmra.mrb[0].mxu0 %v286
    %v400 = vpop.f32.mrb[0].mxu0
    %v401 = vadd.f32 %v308, %v400
    %v402 = vpop.f32.mrb[0].mxu0
    %v403 = vpop.f32.mrb[0].mxu0
    %v404 = vadd.f32 %v308, %v403
    %v405 = vpop.f32.mrb[0].mxu0
    %406 = vdwg.mxu0
    %v407 = vmax.f32 %v393, 0.0
    %v408 = vmax.f32 %v396, 0.0
    %v409 = vmax.f32 %v401, 0.0
    %v410 = vmax.f32 %v404, 0.0
    %411 = vadd.xlane.f32.xlu0 %v407
    %v412 = vpop.xlane.xlu0 %411
    %413 = vadd.xlane.f32.xlu0 %v408
    %v414 = vpop.xlane.xlu0 %413
    %415 = vadd.xlane.f32.xlu0 %v409
    %v416 = vpop.xlane.xlu0 %415
    %417 = vadd.xlane.f32.xlu0 %v410
    %v418 = vpop.xlane.xlu0 %417
    %v419 = vmul.f32 %v412, 0.015625
    %v420 = vmul.f32 %v414, 0.015625
    %v421 = vmul.f32 %v416, 0.015625
    %v422 = vmul.f32 %v418, 0.015625
    %v423 = vsub.f32 %v407, %v419
    %v424 = vsub.f32 %v408, %v420
    %v425 = vsub.f32 %v409, %v421
    %v426 = vsub.f32 %v410, %v422
    %v427 = vmul.f32 %v423, %v423
    %v428 = vmul.f32 %v424, %v424
    %v429 = vmul.f32 %v425, %v425
    %v430 = vmul.f32 %v426, %v426
    %v431 = vmul.f32 %v427, %v210
    %v432 = vmul.f32 %v428, %v210
    %v433 = vmul.f32 %v429, %v210
    %v434 = vmul.f32 %v430, %v210
    %435 = vadd.xlane.f32.xlu0 %v431
    %v436 = vpop.xlane.xlu0 %435
    %437 = vadd.xlane.f32.xlu0 %v432
    %v438 = vpop.xlane.xlu0 %437
    %439 = vadd.xlane.f32.xlu0 %v433
    %v440 = vpop.xlane.xlu0 %439
    %441 = vadd.xlane.f32.xlu0 %v434
    %v442 = vpop.xlane.xlu0 %441
    %v443 = vmul.f32 %v436, 0.015625
    %v444 = vmul.f32 %v438, 0.015625
    %v445 = vmul.f32 %v440, 0.015625
    %v446 = vmul.f32 %v442, 0.015625
    %v447 = vadd.f32 %v443, 1e-05
    %v448 = vadd.f32 %v444, 1e-05
    %v449 = vadd.f32 %v445, 1e-05
    %v450 = vadd.f32 %v446, 1e-05
    %v451 = vrsqrt.pop %v447
    %v452 = vrsqrt.pop %v448
    %v453 = vrsqrt.pop %v449
    %v454 = vrsqrt.pop %v450
    %v455 = vmul.f32 %v423, %v451
    %v456 = vmul.f32 %v424, %v452
    %v457 = vmul.f32 %v425, %v453
    %v458 = vmul.f32 %v426, %v454
    %v459 = vld [vmem:[#allocation11] sm:$0x1]
    %v461 = vlaneseq
    %v462 = vshrl.u32 %v461, 7
    %v463 = vsub.s32 0, %v462
    %v464 = vrot.slane %v459, %v463
    %v466 = vmul.f32 %v455, %v464
    %v467 = vmul.f32 %v456, %v464
    %v468 = vmul.f32 %v457, %v464
    %v469 = vmul.f32 %v458, %v464
    %v470 = vld [vmem:[#allocation13] sm:$0x1]
    %v472 = vlaneseq
    %v473 = vshrl.u32 %v472, 7
    %v474 = vsub.s32 0, %v473
    %v475 = vrot.slane %v470, %v474
    %v477 = vadd.f32 %v466, %v475
    %v478 = vadd.f32 %v467, %v475
    %v479 = vadd.f32 %v468, %v475
    %v480 = vadd.f32 %v469, %v475
    %v481 = vpack.c.bf16 %v478, %v477
    %v482 = vpack.c.bf16 %v480, %v479
    %v483 = vld [vmem:[%s10] sm:$0xf]
    %v484 = vld [vmem:[%s10 + $0x4] sm:$0xf]
    %v485 = vld [vmem:[%s10 + $0x8] sm:$0xf]
    %v486 = vld [vmem:[%s10 + $0xc] sm:$0xf]
    %v487 = vld [vmem:[%s10 + $0x10] sm:$0xf]
    %v488 = vld [vmem:[%s10 + $0x14] sm:$0xf]
    %v489 = vld [vmem:[%s10 + $0x18] sm:$0xf]
    %v490 = vld [vmem:[%s10 + $0x1c] sm:$0xf]
    %v491 = vld [vmem:[%s10 + $0x20] sm:$0xf]
    %v492 = vld [vmem:[%s10 + $0x24] sm:$0xf]
    %v493 = vld [vmem:[%s10 + $0x28] sm:$0xf]
    %v494 = vld [vmem:[%s10 + $0x2c] sm:$0xf]
    %v495 = vld [vmem:[%s10 + $0x30] sm:$0xf]
    %v496 = vld [vmem:[%s10 + $0x34] sm:$0xf]
    %v497 = vld [vmem:[%s10 + $0x38] sm:$0xf]
    %v498 = vld [vmem:[%s10 + $0x3c] sm:$0xf]
    %v499 = vld [vmem:[%s11] sm:$0x1]
    %v501 = vlaneseq
    %v502 = vshrl.u32 %v501, 7
    %v503 = vsub.s32 0, %v502
    %v504 = vrot.slane %v499, %v503
    %v522 = vunpack.c.l.b16 %v483
    %v523 = vunpack.c.l.b16 %v484
    %v524 = vunpack.c.l.b16 %v485
    %v525 = vunpack.c.l.b16 %v486
    %v526 = vunpack.c.l.b16 %v487
    %v527 = vunpack.c.l.b16 %v488
    %v528 = vunpack.c.l.b16 %v489
    %v529 = vunpack.c.l.b16 %v490
    %v530 = vunpack.c.l.b16 %v491
    %v531 = vunpack.c.l.b16 %v492
    %v532 = vunpack.c.l.b16 %v493
    %v533 = vunpack.c.l.b16 %v494
    %v534 = vunpack.c.l.b16 %v495
    %v535 = vunpack.c.l.b16 %v496
    %v536 = vunpack.c.l.b16 %v497
    %v537 = vunpack.c.l.b16 %v498
    %v538 = vpack.c.b16 %v523, %v522
    %v539 = vpack.c.b16 %v525, %v524
    %v540 = vpack.c.b16 %v527, %v526
    %v541 = vpack.c.b16 %v529, %v528
    %v542 = vpack.c.b16 %v531, %v530
    %v543 = vpack.c.b16 %v533, %v532
    %v544 = vpack.c.b16 %v535, %v534
    %v545 = vpack.c.b16 %v537, %v536
    %554 = vmatprep.subr.bf16.mxu0 0
    %555 = vmatpush1.bf16.msra.mxu0 %v538
    %556 = vmatprep.subr.bf16.mxu0 0
    %557 = vmatpush1.bf16.msra.mxu0 %v539
    %558 = vmatprep.subr.bf16.mxu0 0
    %559 = vmatpush1.bf16.msra.mxu0 %v540
    %560 = vmatprep.subr.bf16.mxu0 0
    %561 = vmatpush1.bf16.msra.mxu0 %v541
    %562 = vmatprep.subr.bf16.mxu0 0
    %563 = vmatpush1.bf16.msra.mxu0 %v542
    %564 = vmatprep.subr.bf16.mxu0 0
    %565 = vmatpush1.bf16.msra.mxu0 %v543
    %566 = vmatprep.subr.bf16.mxu0 0
    %567 = vmatpush1.bf16.msra.mxu0 %v544
    %568 = vmatprep.subr.bf16.mxu0 0
    %569 = vmatpush1.bf16.msra.mxu0 %v545
    %570 = vmatprep.subr.bf16.mxu0 0
    %571 = vmatpush1.bf16.msra.mxu0 0
    %572 = vmatprep.subr.bf16.mxu0 0
    %573 = vmatpush1.bf16.msra.mxu0 0
    %574 = vmatprep.subr.bf16.mxu0 0
    %575 = vmatpush1.bf16.msra.mxu0 0
    %576 = vmatprep.subr.bf16.mxu0 0
    %577 = vmatpush1.bf16.msra.mxu0 0
    %578 = vmatprep.subr.bf16.mxu0 0
    %579 = vmatpush1.bf16.msra.mxu0 0
    %580 = vmatprep.subr.bf16.mxu0 0
    %581 = vmatpush1.bf16.msra.mxu0 0
    %582 = vmatprep.subr.bf16.mxu0 0
    %583 = vmatpush1.bf16.msra.mxu0 0
    %584 = vmatprep.subr.bf16.mxu0 0
    %585 = vmatpush1.bf16.msra.mxu0 0
    %586 = vmatprep.mubr.bf16.mxu0 0
    %587 = vmatmul.mubr.bf16.gmra.mrb[0].mxu0 %v481
    %v588 = vpop.f32.mrb[0].mxu0
    %v589 = vadd.f32 %v504, %v588
    %v590 = vpop.f32.mrb[0].mxu0
    %v591 = vpop.f32.mrb[0].mxu0
    %v592 = vadd.f32 %v504, %v591
    %v593 = vpop.f32.mrb[0].mxu0
    %594 = vmatprep.mubr.bf16.mxu0 0
    %595 = vmatmul.mubr.bf16.gmra.mrb[0].mxu0 %v482
    %v596 = vpop.f32.mrb[0].mxu0
    %v597 = vadd.f32 %v504, %v596
    %v598 = vpop.f32.mrb[0].mxu0
    %v599 = vpop.f32.mrb[0].mxu0
    %v600 = vadd.f32 %v504, %v599
    %v601 = vpop.f32.mrb[0].mxu0
    %602 = vdwg.mxu0
    %v603 = vmax.f32 %v589, 0.0
    %v604 = vmax.f32 %v592, 0.0
    %v605 = vmax.f32 %v597, 0.0
    %v606 = vmax.f32 %v600, 0.0
    %607 = vadd.xlane.f32.xlu0 %v603
    %v608 = vpop.xlane.xlu0 %607
    %609 = vadd.xlane.f32.xlu0 %v604
    %v610 = vpop.xlane.xlu0 %609
    %611 = vadd.xlane.f32.xlu0 %v605
    %v612 = vpop.xlane.xlu0 %611
    %613 = vadd.xlane.f32.xlu0 %v606
    %v614 = vpop.xlane.xlu0 %613
    %v615 = vmul.f32 %v608, 0.015625
    %v616 = vmul.f32 %v610, 0.015625
    %v617 = vmul.f32 %v612, 0.015625
    %v618 = vmul.f32 %v614, 0.015625
    %v619 = vsub.f32 %v603, %v615
    %v620 = vsub.f32 %v604, %v616
    %v621 = vsub.f32 %v605, %v617
    %v622 = vsub.f32 %v606, %v618
    %v623 = vmul.f32 %v619, %v619
    %v624 = vmul.f32 %v620, %v620
    %v625 = vmul.f32 %v621, %v621
    %v626 = vmul.f32 %v622, %v622
    %v627 = vmul.f32 %v623, %v210
    %v628 = vmul.f32 %v624, %v210
    %v629 = vmul.f32 %v625, %v210
    %v630 = vmul.f32 %v626, %v210
    %631 = vadd.xlane.f32.xlu0 %v627
    %v632 = vpop.xlane.xlu0 %631
    %633 = vadd.xlane.f32.xlu0 %v628
    %v634 = vpop.xlane.xlu0 %633
    %635 = vadd.xlane.f32.xlu0 %v629
    %v636 = vpop.xlane.xlu0 %635
    %637 = vadd.xlane.f32.xlu0 %v630
    %v638 = vpop.xlane.xlu0 %637
    %v639 = vmul.f32 %v632, 0.015625
    %v640 = vmul.f32 %v634, 0.015625
    %v641 = vmul.f32 %v636, 0.015625
    %v642 = vmul.f32 %v638, 0.015625
    %v643 = vadd.f32 %v639, 1e-05
    %v644 = vadd.f32 %v640, 1e-05
    %v645 = vadd.f32 %v641, 1e-05
    %v646 = vadd.f32 %v642, 1e-05
    %v647 = vrsqrt.pop %v643
    %v648 = vrsqrt.pop %v644
    %v649 = vrsqrt.pop %v645
    %v650 = vrsqrt.pop %v646
    %v651 = vmul.f32 %v619, %v647
    %v652 = vmul.f32 %v620, %v648
    %v653 = vmul.f32 %v621, %v649
    %v654 = vmul.f32 %v622, %v650
    %v655 = vld [vmem:[%s12] sm:$0x1]
    %v657 = vlaneseq
    %v658 = vshrl.u32 %v657, 7
    %v659 = vsub.s32 0, %v658
    %v660 = vrot.slane %v655, %v659
    %v662 = vmul.f32 %v651, %v660
    %v663 = vmul.f32 %v652, %v660
    %v664 = vmul.f32 %v653, %v660
    %v665 = vmul.f32 %v654, %v660
    %v666 = vld [vmem:[%s13] sm:$0x1]
    %v668 = vlaneseq
    %v669 = vshrl.u32 %v668, 7
    %v670 = vsub.s32 0, %v669
    %v671 = vrot.slane %v666, %v670
    %v673 = vadd.f32 %v662, %v671
    %v674 = vadd.f32 %v663, %v671
    %v675 = vadd.f32 %v664, %v671
    %v676 = vadd.f32 %v665, %v671
    %v677 = vld [vmem:[#allocation5] sm:$0xff]
    %v678 = vld [vmem:[#allocation5 + $0x8] sm:$0xff]
    %v679 = vld [vmem:[#allocation5 + $0x10] sm:$0xff]
    %v680 = vld [vmem:[#allocation5 + $0x18] sm:$0xff]
    %v681 = vld [vmem:[%s2] sm:$0xff]
    %v682 = vld [vmem:[%s2 + $0x8] sm:$0xff]
    %v683 = vld [vmem:[%s2 + $0x10] sm:$0xff]
    %v684 = vld [vmem:[%s2 + $0x18] sm:$0xff]
    %686 = vset.pattern.permute.xlu0 0
    %687 = vperm.xlu0 %686, %v681
    %v688 = vpop.permute.xlu0 %687
    %691 = vset.pattern.permute.xlu0 0
    %692 = vperm.xlu0 %691, %v682
    %v693 = vpop.permute.xlu0 %692
    %696 = vset.pattern.permute.xlu0 0
    %697 = vperm.xlu0 %696, %v683
    %v698 = vpop.permute.xlu0 %697
    %701 = vset.pattern.permute.xlu0 0
    %702 = vperm.xlu0 %701, %v684
    %v703 = vpop.permute.xlu0 %702
    %v705 = vmul.f32 %v677, %v688
    %v706 = vmul.f32 %v678, %v693
    %v707 = vmul.f32 %v679, %v698
    %v708 = vmul.f32 %v680, %v703
    %v709 = vpack.c.bf16 %v674, %v673
    %v710 = vpack.c.bf16 %v676, %v675
    %v711 = vld [vmem:[#allocation14] sm:$0xff]
    %v712 = vld [vmem:[#allocation14 + $0x8] sm:$0xff]
    %v713 = vld [vmem:[#allocation14 + $0x10] sm:$0xff]
    %v714 = vld [vmem:[#allocation14 + $0x18] sm:$0xff]
    %v715 = vld [vmem:[#allocation14 + $0x20] sm:$0xff]
    %v716 = vld [vmem:[#allocation14 + $0x28] sm:$0xff]
    %v717 = vld [vmem:[#allocation14 + $0x30] sm:$0xff]
    %v718 = vld [vmem:[#allocation14 + $0x38] sm:$0xff]
    %v719 = vld [vmem:[#allocation14 + $0x40] sm:$0xff]
    %v720 = vld [vmem:[#allocation14 + $0x48] sm:$0xff]
    %v721 = vld [vmem:[#allocation14 + $0x50] sm:$0xff]
    %v722 = vld [vmem:[#allocation14 + $0x58] sm:$0xff]
    %v723 = vld [vmem:[#allocation14 + $0x60] sm:$0xff]
    %v724 = vld [vmem:[#allocation14 + $0x68] sm:$0xff]
    %v725 = vld [vmem:[#allocation14 + $0x70] sm:$0xff]
    %v726 = vld [vmem:[#allocation14 + $0x78] sm:$0xff]
    %v727 = vld [vmem:[#allocation14 + $0x80] sm:$0xff]
    %v728 = vld [vmem:[#allocation14 + $0x88] sm:$0xff]
    %v729 = vld [vmem:[#allocation14 + $0x90] sm:$0xff]
    %v730 = vld [vmem:[#allocation14 + $0x98] sm:$0xff]
    %v731 = vld [vmem:[#allocation14 + $0xa0] sm:$0xff]
    %v732 = vld [vmem:[#allocation14 + $0xa8] sm:$0xff]
    %v733 = vld [vmem:[#allocation14 + $0xb0] sm:$0xff]
    %v734 = vld [vmem:[#allocation14 + $0xb8] sm:$0xff]
    %v735 = vld [vmem:[#allocation14 + $0xc0] sm:$0xff]
    %v736 = vld [vmem:[#allocation14 + $0xc8] sm:$0xff]
    %v737 = vld [vmem:[#allocation14 + $0xd0] sm:$0xff]
    %v738 = vld [vmem:[#allocation14 + $0xd8] sm:$0xff]
    %v739 = vld [vmem:[#allocation14 + $0xe0] sm:$0xff]
    %v740 = vld [vmem:[#allocation14 + $0xe8] sm:$0xff]
    %v741 = vld [vmem:[#allocation14 + $0xf0] sm:$0xff]
    %v742 = vld [vmem:[#allocation14 + $0xf8] sm:$0xff]
    %v743 = vpack.c.bf16 %v706, %v705
    %v744 = vpack.c.bf16 %v708, %v707
    %v745 = vld [vmem:[#allocation16] sm:$0xff]
    %v746 = vld [vmem:[#allocation16 + $0x8] sm:$0xff]
    %v747 = vld [vmem:[#allocation16 + $0x10] sm:$0xff]
    %v748 = vld [vmem:[#allocation16 + $0x18] sm:$0xff]
    %v749 = vld [vmem:[#allocation16 + $0x20] sm:$0xff]
    %v750 = vld [vmem:[#allocation16 + $0x28] sm:$0xff]
    %v751 = vld [vmem:[#allocation16 + $0x30] sm:$0xff]
    %v752 = vld [vmem:[#allocation16 + $0x38] sm:$0xff]
    %v753 = vld [vmem:[#allocation16 + $0x40] sm:$0xff]
    %v754 = vld [vmem:[#allocation16 + $0x48] sm:$0xff]
    %v755 = vld [vmem:[#allocation16 + $0x50] sm:$0xff]
    %v756 = vld [vmem:[#allocation16 + $0x58] sm:$0xff]
    %v757 = vld [vmem:[#allocation16 + $0x60] sm:$0xff]
    %v758 = vld [vmem:[#allocation16 + $0x68] sm:$0xff]
    %v759 = vld [vmem:[#allocation16 + $0x70] sm:$0xff]
    %v760 = vld [vmem:[#allocation16 + $0x78] sm:$0xff]
    %v761 = vld [vmem:[#allocation16 + $0x80] sm:$0xff]
    %v762 = vld [vmem:[#allocation16 + $0x88] sm:$0xff]
    %v763 = vld [vmem:[#allocation16 + $0x90] sm:$0xff]
    %v764 = vld [vmem:[#allocation16 + $0x98] sm:$0xff]
    %v765 = vld [vmem:[#allocation16 + $0xa0] sm:$0xff]
    %v766 = vld [vmem:[#allocation16 + $0xa8] sm:$0xff]
    %v767 = vld [vmem:[#allocation16 + $0xb0] sm:$0xff]
    %v768 = vld [vmem:[#allocation16 + $0xb8] sm:$0xff]
    %v769 = vld [vmem:[#allocation16 + $0xc0] sm:$0xff]
    %v770 = vld [vmem:[#allocation16 + $0xc8] sm:$0xff]
    %v771 = vld [vmem:[#allocation16 + $0xd0] sm:$0xff]
    %v772 = vld [vmem:[#allocation16 + $0xd8] sm:$0xff]
    %v773 = vld [vmem:[#allocation16 + $0xe0] sm:$0xff]
    %v774 = vld [vmem:[#allocation16 + $0xe8] sm:$0xff]
    %v775 = vld [vmem:[#allocation16 + $0xf0] sm:$0xff]
    %v776 = vld [vmem:[#allocation16 + $0xf8] sm:$0xff]
    %v809 = vunpack.c.l.b16 %v745
    %v810 = vunpack.c.h.b16 %v745
    %v811 = vunpack.c.l.b16 %v746
    %v812 = vunpack.c.h.b16 %v746
    %v813 = vunpack.c.l.b16 %v747
    %v814 = vunpack.c.h.b16 %v747
    %v815 = vunpack.c.l.b16 %v748
    %v816 = vunpack.c.h.b16 %v748
    %v817 = vunpack.c.l.b16 %v749
    %v818 = vunpack.c.h.b16 %v749
    %v819 = vunpack.c.l.b16 %v750
    %v820 = vunpack.c.h.b16 %v750
    %v821 = vunpack.c.l.b16 %v751
    %v822 = vunpack.c.h.b16 %v751
    %v823 = vunpack.c.l.b16 %v752
    %v824 = vunpack.c.h.b16 %v752
    %v825 = vunpack.c.l.b16 %v753
    %v826 = vunpack.c.h.b16 %v753
    %v827 = vunpack.c.l.b16 %v754
    %v828 = vunpack.c.h.b16 %v754
    %v829 = vunpack.c.l.b16 %v755
    %v830 = vunpack.c.h.b16 %v755
    %v831 = vunpack.c.l.b16 %v756
    %v832 = vunpack.c.h.b16 %v756
    %v833 = vunpack.c.l.b16 %v757
    %v834 = vunpack.c.h.b16 %v757
    %v835 = vunpack.c.l.b16 %v758
    %v836 = vunpack.c.h.b16 %v758
    %v837 = vunpack.c.l.b16 %v759
    %v838 = vunpack.c.h.b16 %v759
    %v839 = vunpack.c.l.b16 %v760
    %v840 = vunpack.c.h.b16 %v760
    %v841 = vunpack.c.l.b16 %v761
    %v842 = vunpack.c.h.b16 %v761
    %v843 = vunpack.c.l.b16 %v762
    %v844 = vunpack.c.h.b16 %v762
    %v845 = vunpack.c.l.b16 %v763
    %v846 = vunpack.c.h.b16 %v763
    %v847 = vunpack.c.l.b16 %v764
    %v848 = vunpack.c.h.b16 %v764
    %v849 = vunpack.c.l.b16 %v765
    %v850 = vunpack.c.h.b16 %v765
    %v851 = vunpack.c.l.b16 %v766
    %v852 = vunpack.c.h.b16 %v766
    %v853 = vunpack.c.l.b16 %v767
    %v854 = vunpack.c.h.b16 %v767
    %v855 = vunpack.c.l.b16 %v768
    %v856 = vunpack.c.h.b16 %v768
    %v857 = vunpack.c.l.b16 %v769
    %v858 = vunpack.c.h.b16 %v769
    %v859 = vunpack.c.l.b16 %v770
    %v860 = vunpack.c.h.b16 %v770
    %v861 = vunpack.c.l.b16 %v771
    %v862 = vunpack.c.h.b16 %v771
    %v863 = vunpack.c.l.b16 %v772
    %v864 = vunpack.c.h.b16 %v772
    %v865 = vunpack.c.l.b16 %v773
    %v866 = vunpack.c.h.b16 %v773
    %v867 = vunpack.c.l.b16 %v774
    %v868 = vunpack.c.h.b16 %v774
    %v869 = vunpack.c.l.b16 %v775
    %v870 = vunpack.c.h.b16 %v775
    %v871 = vunpack.c.l.b16 %v776
    %v872 = vunpack.c.h.b16 %v776
    %v873 = vpack.c.b16 %v813, %v809
    %v874 = vpack.c.b16 %v814, %v810
    %v875 = vpack.c.b16 %v815, %v811
    %v876 = vpack.c.b16 %v816, %v812
    %v877 = vpack.c.b16 %v821, %v817
    %v878 = vpack.c.b16 %v822, %v818
    %v879 = vpack.c.b16 %v823, %v819
    %v880 = vpack.c.b16 %v824, %v820
    %v881 = vpack.c.b16 %v829, %v825
    %v882 = vpack.c.b16 %v830, %v826
    %v883 = vpack.c.b16 %v831, %v827
    %v884 = vpack.c.b16 %v832, %v828
    %v885 = vpack.c.b16 %v837, %v833
    %v886 = vpack.c.b16 %v838, %v834
    %v887 = vpack.c.b16 %v839, %v835
    %v888 = vpack.c.b16 %v840, %v836
    %v889 = vpack.c.b16 %v845, %v841
    %v890 = vpack.c.b16 %v846, %v842
    %v891 = vpack.c.b16 %v847, %v843
    %v892 = vpack.c.b16 %v848, %v844
    %v893 = vpack.c.b16 %v853, %v849
    %v894 = vpack.c.b16 %v854, %v850
    %v895 = vpack.c.b16 %v855, %v851
    %v896 = vpack.c.b16 %v856, %v852
    %v897 = vpack.c.b16 %v861, %v857
    %v898 = vpack.c.b16 %v862, %v858
    %v899 = vpack.c.b16 %v863, %v859
    %v900 = vpack.c.b16 %v864, %v860
    %v901 = vpack.c.b16 %v869, %v865
    %v902 = vpack.c.b16 %v870, %v866
    %v903 = vpack.c.b16 %v871, %v867
    %v904 = vpack.c.b16 %v872, %v868
    %937 = vmatprep.subr.bf16.mxu0 %v874
    %938 = vmatpush1.bf16.msra.mxu0 %v873
    %939 = vmatprep.subr.bf16.mxu0 %v878
    %940 = vmatpush1.bf16.msra.mxu0 %v877
    %941 = vmatprep.subr.bf16.mxu0 %v882
    %942 = vmatpush1.bf16.msra.mxu0 %v881
    %943 = vmatprep.subr.bf16.mxu0 %v886
    %944 = vmatpush1.bf16.msra.mxu0 %v885
    %945 = vmatprep.subr.bf16.mxu0 %v890
    %946 = vmatpush1.bf16.msra.mxu0 %v889
    %947 = vmatprep.subr.bf16.mxu0 %v894
    %948 = vmatpush1.bf16.msra.mxu0 %v893
    %949 = vmatprep.subr.bf16.mxu0 %v898
    %950 = vmatpush1.bf16.msra.mxu0 %v897
    %951 = vmatprep.subr.bf16.mxu0 %v902
    %952 = vmatpush1.bf16.msra.mxu0 %v901
    %953 = vmatprep.subr.bf16.mxu0 0
    %954 = vmatpush1.bf16.msra.mxu0 0
    %955 = vmatprep.subr.bf16.mxu0 0
    %956 = vmatpush1.bf16.msra.mxu0 0
    %957 = vmatprep.subr.bf16.mxu0 0
    %958 = vmatpush1.bf16.msra.mxu0 0
    %959 = vmatprep.subr.bf16.mxu0 0
    %960 = vmatpush1.bf16.msra.mxu0 0
    %961 = vmatprep.subr.bf16.mxu0 0
    %962 = vmatpush1.bf16.msra.mxu0 0
    %963 = vmatprep.subr.bf16.mxu0 0
    %964 = vmatpush1.bf16.msra.mxu0 0
    %965 = vmatprep.subr.bf16.mxu0 0
    %966 = vmatpush1.bf16.msra.mxu0 0
    %967 = vmatprep.subr.bf16.mxu0 0
    %968 = vmatpush1.bf16.msra.mxu0 0
    %969 = vmatprep.mubr.bf16.mxu0 0
    %970 = vmatmul.mubr.bf16.gmra.mrb[0].mxu0 %v743
    %v971 = vpop.f32.mrb[0].mxu0
    %v972 = vadd.f32 0.0, %v971
    %v973 = vpop.f32.mrb[0].mxu0
    %v974 = vadd.f32 0.0, %v973
    %v975 = vpop.f32.mrb[0].mxu0
    %v976 = vadd.f32 0.0, %v975
    %v977 = vpop.f32.mrb[0].mxu0
    %v978 = vadd.f32 0.0, %v977
    %979 = vmatprep.mubr.bf16.mxu0 0
    %980 = vmatmul.mubr.bf16.gmra.mrb[0].mxu0 %v744
    %v981 = vpop.f32.mrb[0].mxu0
    %v982 = vadd.f32 0.0, %v981
    %v983 = vpop.f32.mrb[0].mxu0
    %v984 = vadd.f32 0.0, %v983
    %v985 = vpop.f32.mrb[0].mxu0
    %v986 = vadd.f32 0.0, %v985
    %v987 = vpop.f32.mrb[0].mxu0
    %v988 = vadd.f32 0.0, %v987
    %989 = vdwg.mxu0
    %990 = vmatprep.subr.bf16.mxu0 %v876
    %991 = vmatpush1.bf16.msra.mxu0 %v875
    %992 = vmatprep.subr.bf16.mxu0 %v880
    %993 = vmatpush1.bf16.msra.mxu0 %v879
    %994 = vmatprep.subr.bf16.mxu0 %v884
    %995 = vmatpush1.bf16.msra.mxu0 %v883
    %996 = vmatprep.subr.bf16.mxu0 %v888
    %997 = vmatpush1.bf16.msra.mxu0 %v887
    %998 = vmatprep.subr.bf16.mxu0 %v892
    %999 = vmatpush1.bf16.msra.mxu0 %v891
    %1000 = vmatprep.subr.bf16.mxu0 %v896
    %1001 = vmatpush1.bf16.msra.mxu0 %v895
    %1002 = vmatprep.subr.bf16.mxu0 %v900
    %1003 = vmatpush1.bf16.msra.mxu0 %v899
    %1004 = vmatprep.subr.bf16.mxu0 %v904
    %1005 = vmatpush1.bf16.msra.mxu0 %v903
    %1006 = vmatprep.subr.bf16.mxu0 0
    %1007 = vmatpush1.bf16.msra.mxu0 0
    %1008 = vmatprep.subr.bf16.mxu0 0
    %1009 = vmatpush1.bf16.msra.mxu0 0
    %1010 = vmatprep.subr.bf16.mxu0 0
    %1011 = vmatpush1.bf16.msra.mxu0 0
    %1012 = vmatprep.subr.bf16.mxu0 0
    %1013 = vmatpush1.bf16.msra.mxu0 0
    %1014 = vmatprep.subr.bf16.mxu0 0
    %1015 = vmatpush1.bf16.msra.mxu0 0
    %1016 = vmatprep.subr.bf16.mxu0 0
    %1017 = vmatpush1.bf16.msra.mxu0 0
    %1018 = vmatprep.subr.bf16.mxu0 0
    %1019 = vmatpush1.bf16.msra.mxu0 0
    %1020 = vmatprep.subr.bf16.mxu0 0
    %1021 = vmatpush1.bf16.msra.mxu0 0
    %1022 = vmatprep.mubr.bf16.mxu0 0
    %1023 = vmatmul.mubr.bf16.gmra.mrb[0].mxu0 %v743
    %v1024 = vpop.f32.mrb[0].mxu0
    %v1025 = vadd.f32 0.0, %v1024
    %v1026 = vpop.f32.mrb[0].mxu0
    %v1027 = vadd.f32 0.0, %v1026
    %v1028 = vpop.f32.mrb[0].mxu0
    %v1029 = vadd.f32 0.0, %v1028
    %v1030 = vpop.f32.mrb[0].mxu0
    %v1031 = vadd.f32 0.0, %v1030
    %1032 = vmatprep.mubr.bf16.mxu0 0
    %1033 = vmatmul.mubr.bf16.gmra.mrb[0].mxu0 %v744
    %v1034 = vpop.f32.mrb[0].mxu0
    %v1035 = vadd.f32 0.0, %v1034
    %v1036 = vpop.f32.mrb[0].mxu0
    %v1037 = vadd.f32 0.0, %v1036
    %v1038 = vpop.f32.mrb[0].mxu0
    %v1039 = vadd.f32 0.0, %v1038
    %v1040 = vpop.f32.mrb[0].mxu0
    %v1041 = vadd.f32 0.0, %v1040
    %1042 = vdwg.mxu0
    %v1075 = vunpack.c.l.b16 %v711
    %v1076 = vunpack.c.h.b16 %v711
    %v1077 = vunpack.c.l.b16 %v712
    %v1078 = vunpack.c.h.b16 %v712
    %v1079 = vunpack.c.l.b16 %v713
    %v1080 = vunpack.c.h.b16 %v713
    %v1081 = vunpack.c.l.b16 %v714
    %v1082 = vunpack.c.h.b16 %v714
    %v1083 = vunpack.c.l.b16 %v715
    %v1084 = vunpack.c.h.b16 %v715
    %v1085 = vunpack.c.l.b16 %v716
    %v1086 = vunpack.c.h.b16 %v716
    %v1087 = vunpack.c.l.b16 %v717
    %v1088 = vunpack.c.h.b16 %v717
    %v1089 = vunpack.c.l.b16 %v718
    %v1090 = vunpack.c.h.b16 %v718
    %v1091 = vunpack.c.l.b16 %v719
    %v1092 = vunpack.c.h.b16 %v719
    %v1093 = vunpack.c.l.b16 %v720
    %v1094 = vunpack.c.h.b16 %v720
    %v1095 = vunpack.c.l.b16 %v721
    %v1096 = vunpack.c.h.b16 %v721
    %v1097 = vunpack.c.l.b16 %v722
    %v1098 = vunpack.c.h.b16 %v722
    %v1099 = vunpack.c.l.b16 %v723
    %v1100 = vunpack.c.h.b16 %v723
    %v1101 = vunpack.c.l.b16 %v724
    %v1102 = vunpack.c.h.b16 %v724
    %v1103 = vunpack.c.l.b16 %v725
    %v1104 = vunpack.c.h.b16 %v725
    %v1105 = vunpack.c.l.b16 %v726
    %v1106 = vunpack.c.h.b16 %v726
    %v1107 = vunpack.c.l.b16 %v727
    %v1108 = vunpack.c.h.b16 %v727
    %v1109 = vunpack.c.l.b16 %v728
    %v1110 = vunpack.c.h.b16 %v728
    %v1111 = vunpack.c.l.b16 %v729
    %v1112 = vunpack.c.h.b16 %v729
    %v1113 = vunpack.c.l.b16 %v730
    %v1114 = vunpack.c.h.b16 %v730
    %v1115 = vunpack.c.l.b16 %v731
    %v1116 = vunpack.c.h.b16 %v731
    %v1117 = vunpack.c.l.b16 %v732
    %v1118 = vunpack.c.h.b16 %v732
    %v1119 = vunpack.c.l.b16 %v733
    %v1120 = vunpack.c.h.b16 %v733
    %v1121 = vunpack.c.l.b16 %v734
    %v1122 = vunpack.c.h.b16 %v734
    %v1123 = vunpack.c.l.b16 %v735
    %v1124 = vunpack.c.h.b16 %v735
    %v1125 = vunpack.c.l.b16 %v736
    %v1126 = vunpack.c.h.b16 %v736
    %v1127 = vunpack.c.l.b16 %v737
    %v1128 = vunpack.c.h.b16 %v737
    %v1129 = vunpack.c.l.b16 %v738
    %v1130 = vunpack.c.h.b16 %v738
    %v1131 = vunpack.c.l.b16 %v739
    %v1132 = vunpack.c.h.b16 %v739
    %v1133 = vunpack.c.l.b16 %v740
    %v1134 = vunpack.c.h.b16 %v740
    %v1135 = vunpack.c.l.b16 %v741
    %v1136 = vunpack.c.h.b16 %v741
    %v1137 = vunpack.c.l.b16 %v742
    %v1138 = vunpack.c.h.b16 %v742
    %v1139 = vpack.c.b16 %v1079, %v1075
    %v1140 = vpack.c.b16 %v1080, %v1076
    %v1141 = vpack.c.b16 %v1081, %v1077
    %v1142 = vpack.c.b16 %v1082, %v1078
    %v1143 = vpack.c.b16 %v1087, %v1083
    %v1144 = vpack.c.b16 %v1088, %v1084
    %v1145 = vpack.c.b16 %v1089, %v1085
    %v1146 = vpack.c.b16 %v1090, %v1086
    %v1147 = vpack.c.b16 %v1095, %v1091
    %v1148 = vpack.c.b16 %v1096, %v1092
    %v1149 = vpack.c.b16 %v1097, %v1093
    %v1150 = vpack.c.b16 %v1098, %v1094
    %v1151 = vpack.c.b16 %v1103, %v1099
    %v1152 = vpack.c.b16 %v1104, %v1100
    %v1153 = vpack.c.b16 %v1105, %v1101
    %v1154 = vpack.c.b16 %v1106, %v1102
    %v1155 = vpack.c.b16 %v1111, %v1107
    %v1156 = vpack.c.b16 %v1112, %v1108
    %v1157 = vpack.c.b16 %v1113, %v1109
    %v1158 = vpack.c.b16 %v1114, %v1110
    %v1159 = vpack.c.b16 %v1119, %v1115
    %v1160 = vpack.c.b16 %v1120, %v1116
    %v1161 = vpack.c.b16 %v1121, %v1117
    %v1162 = vpack.c.b16 %v1122, %v1118
    %v1163 = vpack.c.b16 %v1127, %v1123
    %v1164 = vpack.c.b16 %v1128, %v1124
    %v1165 = vpack.c.b16 %v1129, %v1125
    %v1166 = vpack.c.b16 %v1130, %v1126
    %v1167 = vpack.c.b16 %v1135, %v1131
    %v1168 = vpack.c.b16 %v1136, %v1132
    %v1169 = vpack.c.b16 %v1137, %v1133
    %v1170 = vpack.c.b16 %v1138, %v1134
    %1203 = vmatprep.subr.bf16.mxu0 %v1140
    %1204 = vmatpush1.bf16.msra.mxu0 %v1139
    %1205 = vmatprep.subr.bf16.mxu0 %v1144
    %1206 = vmatpush1.bf16.msra.mxu0 %v1143
    %1207 = vmatprep.subr.bf16.mxu0 %v1148
    %1208 = vmatpush1.bf16.msra.mxu0 %v1147
    %1209 = vmatprep.subr.bf16.mxu0 %v1152
    %1210 = vmatpush1.bf16.msra.mxu0 %v1151
    %1211 = vmatprep.subr.bf16.mxu0 %v1156
    %1212 = vmatpush1.bf16.msra.mxu0 %v1155
    %1213 = vmatprep.subr.bf16.mxu0 %v1160
    %1214 = vmatpush1.bf16.msra.mxu0 %v1159
    %1215 = vmatprep.subr.bf16.mxu0 %v1164
    %1216 = vmatpush1.bf16.msra.mxu0 %v1163
    %1217 = vmatprep.subr.bf16.mxu0 %v1168
    %1218 = vmatpush1.bf16.msra.mxu0 %v1167
    %1219 = vmatprep.subr.bf16.mxu0 0
    %1220 = vmatpush1.bf16.msra.mxu0 0
    %1221 = vmatprep.subr.bf16.mxu0 0
    %1222 = vmatpush1.bf16.msra.mxu0 0
    %1223 = vmatprep.subr.bf16.mxu0 0
    %1224 = vmatpush1.bf16.msra.mxu0 0
    %1225 = vmatprep.subr.bf16.mxu0 0
    %1226 = vmatpush1.bf16.msra.mxu0 0
    %1227 = vmatprep.subr.bf16.mxu0 0
    %1228 = vmatpush1.bf16.msra.mxu0 0
    %1229 = vmatprep.subr.bf16.mxu0 0
    %1230 = vmatpush1.bf16.msra.mxu0 0
    %1231 = vmatprep.subr.bf16.mxu0 0
    %1232 = vmatpush1.bf16.msra.mxu0 0
    %1233 = vmatprep.subr.bf16.mxu0 0
    %1234 = vmatpush1.bf16.msra.mxu0 0
    %1235 = vmatprep.mubr.bf16.mxu0 0
    %1236 = vmatmul.mubr.bf16.gmra.mrb[0].mxu0 %v709
    %v1237 = vpop.f32.mrb[0].mxu0
    %v1238 = vadd.f32 %v972, %v1237
    %v1239 = vpop.f32.mrb[0].mxu0
    %v1240 = vadd.f32 %v974, %v1239
    %v1241 = vpop.f32.mrb[0].mxu0
    %v1242 = vadd.f32 %v976, %v1241
    %v1243 = vpop.f32.mrb[0].mxu0
    %v1244 = vadd.f32 %v978, %v1243
    %1245 = vmatprep.mubr.bf16.mxu0 0
    %1246 = vmatmul.mubr.bf16.gmra.mrb[0].mxu0 %v710
    %v1247 = vpop.f32.mrb[0].mxu0
    %v1248 = vadd.f32 %v982, %v1247
    %v1249 = vpop.f32.mrb[0].mxu0
    %v1250 = vadd.f32 %v984, %v1249
    %v1251 = vpop.f32.mrb[0].mxu0
    %v1252 = vadd.f32 %v986, %v1251
    %v1253 = vpop.f32.mrb[0].mxu0
    %v1254 = vadd.f32 %v988, %v1253
    %1255 = vdwg.mxu0
    %1256 = vmatprep.subr.bf16.mxu0 %v1142
    %1257 = vmatpush1.bf16.msra.mxu0 %v1141
    %1258 = vmatprep.subr.bf16.mxu0 %v1146
    %1259 = vmatpush1.bf16.msra.mxu0 %v1145
    %1260 = vmatprep.subr.bf16.mxu0 %v1150
    %1261 = vmatpush1.bf16.msra.mxu0 %v1149
    %1262 = vmatprep.subr.bf16.mxu0 %v1154
    %1263 = vmatpush1.bf16.msra.mxu0 %v1153
    %1264 = vmatprep.subr.bf16.mxu0 %v1158
    %1265 = vmatpush1.bf16.msra.mxu0 %v1157
    %1266 = vmatprep.subr.bf16.mxu0 %v1162
    %1267 = vmatpush1.bf16.msra.mxu0 %v1161
    %1268 = vmatprep.subr.bf16.mxu0 %v1166
    %1269 = vmatpush1.bf16.msra.mxu0 %v1165
    %1270 = vmatprep.subr.bf16.mxu0 %v1170
    %1271 = vmatpush1.bf16.msra.mxu0 %v1169
    %1272 = vmatprep.subr.bf16.mxu0 0
    %1273 = vmatpush1.bf16.msra.mxu0 0
    %1274 = vmatprep.subr.bf16.mxu0 0
    %1275 = vmatpush1.bf16.msra.mxu0 0
    %1276 = vmatprep.subr.bf16.mxu0 0
    %1277 = vmatpush1.bf16.msra.mxu0 0
    %1278 = vmatprep.subr.bf16.mxu0 0
    %1279 = vmatpush1.bf16.msra.mxu0 0
    %1280 = vmatprep.subr.bf16.mxu0 0
    %1281 = vmatpush1.bf16.msra.mxu0 0
    %1282 = vmatprep.subr.bf16.mxu0 0
    %1283 = vmatpush1.bf16.msra.mxu0 0
    %1284 = vmatprep.subr.bf16.mxu0 0
    %1285 = vmatpush1.bf16.msra.mxu0 0
    %1286 = vmatprep.subr.bf16.mxu0 0
    %1287 = vmatpush1.bf16.msra.mxu0 0
    %1288 = vmatprep.mubr.bf16.mxu0 0
    %1289 = vmatmul.mubr.bf16.gmra.mrb[0].mxu0 %v709
    %v1290 = vpop.f32.mrb[0].mxu0
    %v1291 = vadd.f32 %v1025, %v1290
    %v1292 = vpop.f32.mrb[0].mxu0
    %v1293 = vadd.f32 %v1027, %v1292
    %v1294 = vpop.f32.mrb[0].mxu0
    %v1295 = vadd.f32 %v1029, %v1294
    %v1296 = vpop.f32.mrb[0].mxu0
    %v1297 = vadd.f32 %v1031, %v1296
    %1298 = vmatprep.mubr.bf16.mxu0 0
    %1299 = vmatmul.mubr.bf16.gmra.mrb[0].mxu0 %v710
    %v1300 = vpop.f32.mrb[0].mxu0
    %v1301 = vadd.f32 %v1035, %v1300
    %v1302 = vpop.f32.mrb[0].mxu0
    %v1303 = vadd.f32 %v1037, %v1302
    %v1304 = vpop.f32.mrb[0].mxu0
    %v1305 = vadd.f32 %v1039, %v1304
    %v1306 = vpop.f32.mrb[0].mxu0
    %v1307 = vadd.f32 %v1041, %v1306
    %1308 = vdwg.mxu0
    %v1309 = vld [vmem:[%s16] sm:$0xf]
    %v1311 = vlaneseq
    %v1312 = vshrl.u32 %v1311, 7
    %v1313 = vsub.s32 0, %v1312
    %v1314 = vrot.slane %v1309, %v1313
    %v1315 = vlaneseq
    %v1316 = vshrl.u32 %v1315, 7
    %v1317 = vsub.s32 1, %v1316
    %v1318 = vrot.slane %v1309, %v1317
    %v1319 = vlaneseq
    %v1320 = vshrl.u32 %v1319, 7
    %v1321 = vsub.s32 2, %v1320
    %v1322 = vrot.slane %v1309, %v1321
    %v1323 = vlaneseq
    %v1324 = vshrl.u32 %v1323, 7
    %v1325 = vsub.s32 3, %v1324
    %v1326 = vrot.slane %v1309, %v1325
    %v1331 = vadd.f32 %v1238, %v1314
    %v1332 = vadd.f32 %v1240, %v1318
    %v1333 = vadd.f32 %v1291, %v1322
    %v1334 = vadd.f32 %v1293, %v1326
    %v1335 = vadd.f32 %v1242, %v1314
    %v1336 = vadd.f32 %v1244, %v1318
    %v1337 = vadd.f32 %v1295, %v1322
    %v1338 = vadd.f32 %v1297, %v1326
    %v1339 = vadd.f32 %v1248, %v1314
    %v1340 = vadd.f32 %v1250, %v1318
    %v1341 = vadd.f32 %v1301, %v1322
    %v1342 = vadd.f32 %v1303, %v1326
    %v1343 = vadd.f32 %v1252, %v1314
    %v1344 = vadd.f32 %v1254, %v1318
    %v1345 = vadd.f32 %v1305, %v1322
    %v1346 = vadd.f32 %v1307, %v1326
    %v1347 = vxor.u32 %v1331, 2147483648
    %v1348 = vxor.u32 %v1335, 2147483648
    %v1349 = vxor.u32 %v1339, 2147483648
    %v1350 = vxor.u32 %v1343, 2147483648
    %v1351 = vmul.f32 %v1347, 1.442695
    %v1352 = vpow.pop %v1351
    %v1353 = vmul.f32 %v1348, 1.442695
    %v1354 = vpow.pop %v1353
    %v1355 = vmul.f32 %v1349, 1.442695
    %v1356 = vpow.pop %v1355
    %v1357 = vmul.f32 %v1350, 1.442695
    %v1358 = vpow.pop %v1357
    %v1359 = vadd.f32 %v1352, 1.0
    %v1360 = vadd.f32 %v1354, 1.0
    %v1361 = vadd.f32 %v1356, 1.0
    %v1362 = vadd.f32 %v1358, 1.0
    %v1363 = vrcp.pop %v1359
    %v1364 = vmul.f32 1.0, %v1363
    %v1365 = vrcp.pop %v1360
    %v1366 = vmul.f32 1.0, %v1365
    %v1367 = vrcp.pop %v1361
    %v1368 = vmul.f32 1.0, %v1367
    %v1369 = vrcp.pop %v1362
    %v1370 = vmul.f32 1.0, %v1369
    %v1371 = vxor.u32 %v1332, 2147483648
    %v1372 = vxor.u32 %v1336, 2147483648
    %v1373 = vxor.u32 %v1340, 2147483648
    %v1374 = vxor.u32 %v1344, 2147483648
    %v1375 = vmul.f32 %v1371, 1.442695
    %v1376 = vpow.pop %v1375
    %v1377 = vmul.f32 %v1372, 1.442695
    %v1378 = vpow.pop %v1377
    %v1379 = vmul.f32 %v1373, 1.442695
    %v1380 = vpow.pop %v1379
    %v1381 = vmul.f32 %v1374, 1.442695
    %v1382 = vpow.pop %v1381
    %v1383 = vadd.f32 %v1376, 1.0
    %v1384 = vadd.f32 %v1378, 1.0
    %v1385 = vadd.f32 %v1380, 1.0
    %v1386 = vadd.f32 %v1382, 1.0
    %v1387 = vrcp.pop %v1383
    %v1388 = vmul.f32 1.0, %v1387
    %v1389 = vrcp.pop %v1384
    %v1390 = vmul.f32 1.0, %v1389
    %v1391 = vrcp.pop %v1385
    %v1392 = vmul.f32 1.0, %v1391
    %v1393 = vrcp.pop %v1386
    %v1394 = vmul.f32 1.0, %v1393
    %v1395 = vmul.f32 %v1364, %v1334
    %v1396 = vmul.f32 %v1366, %v1338
    %v1397 = vmul.f32 %v1368, %v1342
    %v1398 = vmul.f32 %v1370, %v1346
    %v1399 = vadd.f32 %v1333, %v1395
    %v1400 = vadd.f32 %v1337, %v1396
    %v1401 = vadd.f32 %v1341, %v1397
    %v1402 = vadd.f32 %v1345, %v1398
    %v1403 = vtanh.pop %v1399
    %v1404 = vtanh.pop %v1400
    %v1405 = vtanh.pop %v1401
    %v1406 = vtanh.pop %v1402
    %v1407 = vsub.f32 1.0, %v1388
    %v1408 = vsub.f32 1.0, %v1390
    %v1409 = vsub.f32 1.0, %v1392
    %v1410 = vsub.f32 1.0, %v1394
    %v1411 = vmul.f32 %v1407, %v1403
    %v1412 = vmul.f32 %v1408, %v1404
    %v1413 = vmul.f32 %v1409, %v1405
    %v1414 = vmul.f32 %v1410, %v1406
    %v1415 = vmul.f32 %v1388, %v705
    %v1416 = vmul.f32 %v1390, %v706
    %v1417 = vmul.f32 %v1392, %v707
    %v1418 = vmul.f32 %v1394, %v708
    %v1419 = vadd.f32 %v1411, %v1415
    %v1420 = vadd.f32 %v1412, %v1416
    %v1421 = vadd.f32 %v1413, %v1417
    %v1422 = vadd.f32 %v1414, %v1418
    %1423 = vst [vmem:[#allocation20] sm:$0xff] %v1419
    %1424 = vst [vmem:[#allocation20 + $0x8] sm:$0xff] %v1420
    %1425 = vst [vmem:[#allocation20 + $0x10] sm:$0xff] %v1421
    %1426 = vst [vmem:[#allocation20 + $0x18] sm:$0xff] %v1422
    %1427 = vadd.xlane.f32.xlu0 %v1419
    %v1428 = vpop.xlane.xlu0 %1427
    %1429 = vadd.xlane.f32.xlu0 %v1420
    %v1430 = vpop.xlane.xlu0 %1429
    %1431 = vadd.xlane.f32.xlu0 %v1421
    %v1432 = vpop.xlane.xlu0 %1431
    %1433 = vadd.xlane.f32.xlu0 %v1422
    %v1434 = vpop.xlane.xlu0 %1433
    %v1435 = vmul.f32 %v1428, 0.015625
    %v1436 = vmul.f32 %v1430, 0.015625
    %v1437 = vmul.f32 %v1432, 0.015625
    %v1438 = vmul.f32 %v1434, 0.015625
    %v1439 = vsub.f32 %v1419, %v1435
    %v1440 = vsub.f32 %v1420, %v1436
    %v1441 = vsub.f32 %v1421, %v1437
    %v1442 = vsub.f32 %v1422, %v1438
    %v1443 = vmul.f32 %v1439, %v1439
    %v1444 = vmul.f32 %v1440, %v1440
    %v1445 = vmul.f32 %v1441, %v1441
    %v1446 = vmul.f32 %v1442, %v1442
    %v1447 = vmul.f32 %v1443, %v210
    %v1448 = vmul.f32 %v1444, %v210
    %v1449 = vmul.f32 %v1445, %v210
    %v1450 = vmul.f32 %v1446, %v210
    %1451 = vadd.xlane.f32.xlu0 %v1447
    %v1452 = vpop.xlane.xlu0 %1451
    %1453 = vadd.xlane.f32.xlu0 %v1448
    %v1454 = vpop.xlane.xlu0 %1453
    %1455 = vadd.xlane.f32.xlu0 %v1449
    %v1456 = vpop.xlane.xlu0 %1455
    %1457 = vadd.xlane.f32.xlu0 %v1450
    %v1458 = vpop.xlane.xlu0 %1457
    %v1459 = vmul.f32 %v1452, 0.015625
    %v1460 = vmul.f32 %v1454, 0.015625
    %v1461 = vmul.f32 %v1456, 0.015625
    %v1462 = vmul.f32 %v1458, 0.015625
    %v1463 = vadd.f32 %v1459, 1e-05
    %v1464 = vadd.f32 %v1460, 1e-05
    %v1465 = vadd.f32 %v1461, 1e-05
    %v1466 = vadd.f32 %v1462, 1e-05
    %v1467 = vrsqrt.pop %v1463
    %v1468 = vrsqrt.pop %v1464
    %v1469 = vrsqrt.pop %v1465
    %v1470 = vrsqrt.pop %v1466
    %v1471 = vmul.f32 %v1439, %v1467
    %v1472 = vmul.f32 %v1440, %v1468
    %v1473 = vmul.f32 %v1441, %v1469
    %v1474 = vmul.f32 %v1442, %v1470
    %v1475 = vld [vmem:[%s17] sm:$0x1]
    %v1477 = vlaneseq
    %v1478 = vshrl.u32 %v1477, 7
    %v1479 = vsub.s32 0, %v1478
    %v1480 = vrot.slane %v1475, %v1479
    %v1482 = vmul.f32 %v1471, %v1480
    %v1483 = vmul.f32 %v1472, %v1480
    %v1484 = vmul.f32 %v1473, %v1480
    %v1485 = vmul.f32 %v1474, %v1480
    %v1486 = vld [vmem:[%s18] sm:$0x1]
    %v1488 = vlaneseq
    %v1489 = vshrl.u32 %v1488, 7
    %v1490 = vsub.s32 0, %v1489
    %v1491 = vrot.slane %v1486, %v1490
    %v1493 = vadd.f32 %v1482, %v1491
    %v1494 = vadd.f32 %v1483, %v1491
    %v1495 = vadd.f32 %v1484, %v1491
    %v1496 = vadd.f32 %v1485, %v1491
    %v1497 = vpack.c.bf16 %v1494, %v1493
    %v1498 = vpack.c.bf16 %v1496, %v1495
    %v1499 = vld [vmem:[#allocation17] sm:$0xf]
    %v1500 = vld [vmem:[#allocation17 + $0x4] sm:$0xf]
    %v1501 = vld [vmem:[#allocation17 + $0x8] sm:$0xf]
    %v1502 = vld [vmem:[#allocation17 + $0xc] sm:$0xf]
    %v1503 = vld [vmem:[#allocation17 + $0x10] sm:$0xf]
    %v1504 = vld [vmem:[#allocation17 + $0x14] sm:$0xf]
    %v1505 = vld [vmem:[#allocation17 + $0x18] sm:$0xf]
    %v1506 = vld [vmem:[#allocation17 + $0x1c] sm:$0xf]
    %v1507 = vld [vmem:[#allocation17 + $0x20] sm:$0xf]
    %v1508 = vld [vmem:[#allocation17 + $0x24] sm:$0xf]
    %v1509 = vld [vmem:[#allocation17 + $0x28] sm:$0xf]
    %v1510 = vld [vmem:[#allocation17 + $0x2c] sm:$0xf]
    %v1511 = vld [vmem:[#allocation17 + $0x30] sm:$0xf]
    %v1512 = vld [vmem:[#allocation17 + $0x34] sm:$0xf]
    %v1513 = vld [vmem:[#allocation17 + $0x38] sm:$0xf]
    %v1514 = vld [vmem:[#allocation17 + $0x3c] sm:$0xf]
    %v1515 = vld [vmem:[%s20] sm:$0x1]
    %v1517 = vlaneseq
    %v1518 = vshrl.u32 %v1517, 7
    %v1519 = vsub.s32 0, %v1518
    %v1520 = vrot.slane %v1515, %v1519
    %v1538 = vunpack.c.l.b16 %v1499
    %v1539 = vunpack.c.l.b16 %v1500
    %v1540 = vunpack.c.l.b16 %v1501
    %v1541 = vunpack.c.l.b16 %v1502
    %v1542 = vunpack.c.l.b16 %v1503
    %v1543 = vunpack.c.l.b16 %v1504
    %v1544 = vunpack.c.l.b16 %v1505
    %v1545 = vunpack.c.l.b16 %v1506
    %v1546 = vunpack.c.l.b16 %v1507
    %v1547 = vunpack.c.l.b16 %v1508
    %v1548 = vunpack.c.l.b16 %v1509
    %v1549 = vunpack.c.l.b16 %v1510
    %v1550 = vunpack.c.l.b16 %v1511
    %v1551 = vunpack.c.l.b16 %v1512
    %v1552 = vunpack.c.l.b16 %v1513
    %v1553 = vunpack.c.l.b16 %v1514
    %v1554 = vpack.c.b16 %v1539, %v1538
    %v1555 = vpack.c.b16 %v1541, %v1540
    %v1556 = vpack.c.b16 %v1543, %v1542
    %v1557 = vpack.c.b16 %v1545, %v1544
    %v1558 = vpack.c.b16 %v1547, %v1546
    %v1559 = vpack.c.b16 %v1549, %v1548
    %v1560 = vpack.c.b16 %v1551, %v1550
    %v1561 = vpack.c.b16 %v1553, %v1552
    %1570 = vmatprep.subr.bf16.mxu0 0
    %1571 = vmatpush1.bf16.msra.mxu0 %v1554
    %1572 = vmatprep.subr.bf16.mxu0 0
    %1573 = vmatpush1.bf16.msra.mxu0 %v1555
    %1574 = vmatprep.subr.bf16.mxu0 0
    %1575 = vmatpush1.bf16.msra.mxu0 %v1556
    %1576 = vmatprep.subr.bf16.mxu0 0
    %1577 = vmatpush1.bf16.msra.mxu0 %v1557
    %1578 = vmatprep.subr.bf16.mxu0 0
    %1579 = vmatpush1.bf16.msra.mxu0 %v1558
    %1580 = vmatprep.subr.bf16.mxu0 0
    %1581 = vmatpush1.bf16.msra.mxu0 %v1559
    %1582 = vmatprep.subr.bf16.mxu0 0
    %1583 = vmatpush1.bf16.msra.mxu0 %v1560
    %1584 = vmatprep.subr.bf16.mxu0 0
    %1585 = vmatpush1.bf16.msra.mxu0 %v1561
    %1586 = vmatprep.subr.bf16.mxu0 0
    %1587 = vmatpush1.bf16.msra.mxu0 0
    %1588 = vmatprep.subr.bf16.mxu0 0
    %1589 = vmatpush1.bf16.msra.mxu0 0
    %1590 = vmatprep.subr.bf16.mxu0 0
    %1591 = vmatpush1.bf16.msra.mxu0 0
    %1592 = vmatprep.subr.bf16.mxu0 0
    %1593 = vmatpush1.bf16.msra.mxu0 0
    %1594 = vmatprep.subr.bf16.mxu0 0
    %1595 = vmatpush1.bf16.msra.mxu0 0
    %1596 = vmatprep.subr.bf16.mxu0 0
    %1597 = vmatpush1.bf16.msra.mxu0 0
    %1598 = vmatprep.subr.bf16.mxu0 0
    %1599 = vmatpush1.bf16.msra.mxu0 0
    %1600 = vmatprep.subr.bf16.mxu0 0
    %1601 = vmatpush1.bf16.msra.mxu0 0
    %1602 = vmatprep.mubr.bf16.mxu0 0
    %1603 = vmatmul.mubr.bf16.gmra.mrb[0].mxu0 %v1497
    %v1604 = vpop.f32.mrb[0].mxu0
    %v1605 = vadd.f32 %v1520, %v1604
    %v1606 = vpop.f32.mrb[0].mxu0
    %v1607 = vpop.f32.mrb[0].mxu0
    %v1608 = vadd.f32 %v1520, %v1607
    %v1609 = vpop.f32.mrb[0].mxu0
    %1610 = vmatprep.mubr.bf16.mxu0 0
    %1611 = vmatmul.mubr.bf16.gmra.mrb[0].mxu0 %v1498
    %v1612 = vpop.f32.mrb[0].mxu0
    %v1613 = vadd.f32 %v1520, %v1612
    %v1614 = vpop.f32.mrb[0].mxu0
    %v1615 = vpop.f32.mrb[0].mxu0
    %v1616 = vadd.f32 %v1520, %v1615
    %v1617 = vpop.f32.mrb[0].mxu0
    %1618 = vdwg.mxu0
    %vm1619 = vcmp.lt.s32.totalorder %v204, 8
    %v1620 = vld [vmem:[#allocation7] sm:$0xff]
    %vm1621 = vnez %v1620
    %v1622 = vsel %vm1621, 16843009, 0
    %v1623 = vunpack.c.0.s8 %v1622
    %v1624 = vunpack.c.1.s8 %v1622
    %v1625 = vunpack.c.2.s8 %v1622
    %v1626 = vunpack.c.3.s8 %v1622
    %v1627 = vpack.c.b16 %v1623, %v1623
    %v1628 = vpack.c.b8 %v1627, %v1627
    %v1629 = vpack.c.b16 %v1624, %v1624
    %v1630 = vpack.c.b8 %v1629, %v1629
    %v1631 = vpack.c.b16 %v1625, %v1625
    %v1632 = vpack.c.b8 %v1631, %v1631
    %v1633 = vpack.c.b16 %v1626, %v1626
    %v1634 = vpack.c.b8 %v1633, %v1633
    %vm1635 = vnez %v1628
    %vm1636 = vnez %v1630
    %vm1637 = vnez %v1632
    %vm1638 = vnez %v1634
    %v1639 = vsel %vm1635, 16843009, 0
    %v1640 = vsel %vm1636, 16843009, 0
    %v1641 = vsel %vm1637, 16843009, 0
    %v1642 = vsel %vm1638, 16843009, 0
    %v1643 = vunpack.c.0.s8 %v1639
    %v1644 = vunpack.c.0.s8 %v1640
    %v1645 = vunpack.c.0.s8 %v1641
    %v1646 = vunpack.c.0.s8 %v1642
    %vm1647 = vcmp.ne.s32.totalorder %v1643, 0
    %vm1648 = vcmp.ne.s32.totalorder %v1644, 0
    %vm1649 = vcmp.ne.s32.totalorder %v1645, 0
    %vm1650 = vcmp.ne.s32.totalorder %v1646, 0
    %v1651 = vsel %vm1647, %v1605, -1e+10
    %v1652 = vsel %vm1648, %v1608, -1e+10
    %v1653 = vsel %vm1649, %v1613, -1e+10
    %v1654 = vsel %vm1650, %v1616, -1e+10
    %v1655 = vsel %vm1619, %v1651, -1e+30
    %v1656 = vsel %vm1619, %v1652, -1e+30
    %v1657 = vsel %vm1619, %v1653, -1e+30
    %v1658 = vsel %vm1619, %v1654, -1e+30
    %1659 = vmax.xlane.f32.xlu0 %v1655
    %v1660 = vpop.xlane.xlu0 %1659
    %1661 = vmax.xlane.f32.xlu0 %v1656
    %v1662 = vpop.xlane.xlu0 %1661
    %1663 = vmax.xlane.f32.xlu0 %v1657
    %v1664 = vpop.xlane.xlu0 %1663
    %1665 = vmax.xlane.f32.xlu0 %v1658
    %v1666 = vpop.xlane.xlu0 %1665
    %v1667 = vsub.f32 %v1655, %v1660
    %v1668 = vsub.f32 %v1656, %v1662
    %v1669 = vsub.f32 %v1657, %v1664
    %v1670 = vsub.f32 %v1658, %v1666
    %v1671 = vmul.f32 %v1667, 1.442695
    %v1672 = vpow.pop %v1671
    %v1673 = vmul.f32 %v1668, 1.442695
    %v1674 = vpow.pop %v1673
    %v1675 = vmul.f32 %v1669, 1.442695
    %v1676 = vpow.pop %v1675
    %v1677 = vmul.f32 %v1670, 1.442695
    %v1678 = vpow.pop %v1677
    %1679 = vadd.xlane.f32.xlu0 %v1672
    %v1680 = vpop.xlane.xlu0 %1679
    %1681 = vadd.xlane.f32.xlu0 %v1674
    %v1682 = vpop.xlane.xlu0 %1681
    %1683 = vadd.xlane.f32.xlu0 %v1676
    %v1684 = vpop.xlane.xlu0 %1683
    %1685 = vadd.xlane.f32.xlu0 %v1678
    %v1686 = vpop.xlane.xlu0 %1685
    %v1687 = vlog2.pop %v1680
    %v1688 = vmul.f32 %v1687, 0.6931472
    %v1689 = vlog2.pop %v1682
    %v1690 = vmul.f32 %v1689, 0.6931472
    %v1691 = vlog2.pop %v1684
    %v1692 = vmul.f32 %v1691, 0.6931472
    %v1693 = vlog2.pop %v1686
    %v1694 = vmul.f32 %v1693, 0.6931472
    %v1695 = vadd.f32 %v1660, %v1688
    %v1696 = vadd.f32 %v1662, %v1690
    %v1697 = vadd.f32 %v1664, %v1692
    %v1698 = vadd.f32 %v1666, %v1694
    %vm1699 = vcmp.ge.f32.partialorder %v1655, %v1660
    %vm1700 = vcmp.ge.f32.partialorder %v1656, %v1662
    %vm1701 = vcmp.ge.f32.partialorder %v1657, %v1664
    %vm1702 = vcmp.ge.f32.partialorder %v1658, %v1666
    %v1703 = vsel %vm1699, %v204, 128
    %v1704 = vsel %vm1700, %v204, 128
    %v1705 = vsel %vm1701, %v204, 128
    %v1706 = vsel %vm1702, %v204, 128
    %v1707 = vand.u32 %v1703, 65535
    %v1708 = vshra.s32 %v1703, 16
    %v1709 = vcvt.s32.f32 %v1707
    %v1710 = vcvt.s32.f32 %v1708
    %1711 = vmin.xlane.f32.xlu0 %v1710
    %v1712 = vpop.xlane.xlu0 %1711
    %vm1713 = vcmp.eq.f32.partialorder %v1710, %v1712
    %v1714 = vsel %vm1713, %v1709, inf
    %1715 = vmin.xlane.f32.xlu0 %v1714
    %v1716 = vpop.xlane.xlu0 %1715
    %v1717 = vcvt.f32.s32 %v1716
    %v1718 = vcvt.f32.s32 %v1712
    %v1719 = vshll.u32 %v1718, 16
    %v1720 = vadd.s32 %v1719, %v1717
    %v1721 = vand.u32 %v1704, 65535
    %v1722 = vshra.s32 %v1704, 16
    %v1723 = vcvt.s32.f32 %v1721
    %v1724 = vcvt.s32.f32 %v1722
    %1725 = vmin.xlane.f32.xlu0 %v1724
    %v1726 = vpop.xlane.xlu0 %1725
    %vm1727 = vcmp.eq.f32.partialorder %v1724, %v1726
    %v1728 = vsel %vm1727, %v1723, inf
    %1729 = vmin.xlane.f32.xlu0 %v1728
    %v1730 = vpop.xlane.xlu0 %1729
    %v1731 = vcvt.f32.s32 %v1730
    %v1732 = vcvt.f32.s32 %v1726
    %v1733 = vshll.u32 %v1732, 16
    %v1734 = vadd.s32 %v1733, %v1731
    %v1735 = vand.u32 %v1705, 65535
    %v1736 = vshra.s32 %v1705, 16
    %v1737 = vcvt.s32.f32 %v1735
    %v1738 = vcvt.s32.f32 %v1736
    %1739 = vmin.xlane.f32.xlu0 %v1738
    %v1740 = vpop.xlane.xlu0 %1739
    %vm1741 = vcmp.eq.f32.partialorder %v1738, %v1740
    %v1742 = vsel %vm1741, %v1737, inf
    %1743 = vmin.xlane.f32.xlu0 %v1742
    %v1744 = vpop.xlane.xlu0 %1743
    %v1745 = vcvt.f32.s32 %v1744
    %v1746 = vcvt.f32.s32 %v1740
    %v1747 = vshll.u32 %v1746, 16
    %v1748 = vadd.s32 %v1747, %v1745
    %v1749 = vand.u32 %v1706, 65535
    %v1750 = vshra.s32 %v1706, 16
    %v1751 = vcvt.s32.f32 %v1749
    %v1752 = vcvt.s32.f32 %v1750
    %1753 = vmin.xlane.f32.xlu0 %v1752
    %v1754 = vpop.xlane.xlu0 %1753
    %vm1755 = vcmp.eq.f32.partialorder %v1752, %v1754
    %v1756 = vsel %vm1755, %v1751, inf
    %1757 = vmin.xlane.f32.xlu0 %v1756
    %v1758 = vpop.xlane.xlu0 %1757
    %v1759 = vcvt.f32.s32 %v1758
    %v1760 = vcvt.f32.s32 %v1754
    %v1761 = vshll.u32 %v1760, 16
    %v1762 = vadd.s32 %v1761, %v1759
    %v1763 = vcvt.s32.f32 %v1720
    %v1764 = vcvt.s32.f32 %v1734
    %v1765 = vcvt.s32.f32 %v1748
    %v1766 = vcvt.s32.f32 %v1762
    %v1767 = vsub.f32 %v1660, %v1695
    %v1768 = vsub.f32 %v1662, %v1696
    %v1769 = vsub.f32 %v1664, %v1697
    %v1770 = vsub.f32 %v1666, %v1698
    %vm1771 = vcmp.eq.s32.totalorder %v204, 0
    %vm1772 = vcmp.eq.s32.totalorder %v204, 1
    %v1773 = vsel %vm1772, %v1767, 0.0
    %v1774 = vsel %vm1772, %v1768, 0.0
    %v1775 = vsel %vm1772, %v1769, 0.0
    %v1776 = vsel %vm1772, %v1770, 0.0
    %v1777 = vsel %vm1771, %v1763, %v1773
    %v1778 = vsel %vm1771, %v1764, %v1774
    %v1779 = vsel %vm1771, %v1765, %v1775
    %v1780 = vsel %vm1771, %v1766, %v1776
    %1781 = vst [vmem:[#allocation19] sm:$0xff] %v1777
    %1782 = vst [vmem:[#allocation19 + $0x8] sm:$0xff] %v1778
    %1783 = vst [vmem:[#allocation19 + $0x10] sm:$0xff] %v1779
    %1784 = vst [vmem:[#allocation19 + $0x18] sm:$0xff] %v1780
    // Predicated region
    $region126: #{tpu_custom_call.1} parent=1 // pred_check
      _
    $region127: #{tpu_custom_call.1} parent=1 // pred_check_branch
      %1786 = sbr.rel (0) target = $region129
    $region128: #{tpu_custom_call.1} parent=1 // pred_region
      %s1788 = ssub.s32 512, 512
      %1789 = vsyncadd [#allocation4], %s1788
      %s1790 = sshll.u32 [#allocation19], 4
      %s1791 = int_to_ptr.vmem [resolvable:$true] %s1790
      %1796 = dma.vmem_to_hbm [thread:$0]  %s1791, 512, %s21, [#allocation4], 128, 128, 8
    $region129: #{tpu_custom_call.1} parent=1 // pred_fallthru
      _
    // Predicated region
    $region130: #{tpu_custom_call.1} parent=1 // pred_check
      _
    $region131: #{tpu_custom_call.1} parent=1 // pred_check_branch
      %1798 = sbr.rel (0) target = $region133
    $region132: #{tpu_custom_call.1} parent=1 // pred_region
      %s1800 = ssub.s32 512, 512
      %1801 = vsyncadd [#allocation21], %s1800
      %s1802 = sshll.u32 [#allocation20], 4
      %s1803 = int_to_ptr.vmem [resolvable:$true] %s1802
      %1808 = dma.vmem_to_hbm [thread:$0]  %s1803, 512, %s22, [#allocation21], 128, 128, 8
    $region133: #{tpu_custom_call.1} parent=1 // pred_fallthru
      _
    // Predicated region
    $region134: #{tpu_custom_call.1} parent=1 // pred_check
      _
    $region135: #{tpu_custom_call.1} parent=1 // pred_check_branch
      %1810 = sbr.rel (0) target = $region137
    $region136: #{tpu_custom_call.1} parent=1 // pred_region
      %1811 = dma.done [#allocation4], 512
    $region137: #{tpu_custom_call.1} parent=1 // pred_fallthru
      _
    // Predicated region
    $region138: #{tpu_custom_call.1} parent=1 // pred_check
      _
    $region139: #{tpu_custom_call.1} parent=1 // pred_check_branch
      %1813 = sbr.rel (0) target = $region141
    $region140: #{tpu_custom_call.1} parent=1 // pred_region
      %1814 = dma.done [#allocation21], 512
    $region141: #{tpu_custom_call.1} parent=1 // pred_fallthru
      _
    %1815 = vsyncpa [#allocation3], 1
    %1816 = vsyncpa [#allocation6], 1
    %1817 = vsyncpa [#allocation9], 1
    %1818 = vsyncpa [#allocation12], 1
    %1819 = vsyncpa [#allocation15], 1
    %1820 = vsyncpa [#allocation18], 1
    %1821 = vsyncpa [#allocation4], 1
    %1822 = vsyncpa [#allocation21], 1

</llo_original>
